<compile_context>
chip_gen: v7x
topology: tpu7x:2x2x1
jax: 0.10.0
libtpu: 0.0.40
codegen_flags: <defaults>
</compile_context>

<pallas_src>
import functools

import numpy as np
import jax
import jax.numpy as jnp
from jax.experimental import pallas as pl
from jax.experimental.pallas import tpu as pltpu


def _convt_relu_kernel(x_ref, e_ref, w_ref, b_ref, o_ref, *,
                       n_batch, cin, kh_sz, kw_sz, wp, lw, lwp):
    """Whole-batch transposed conv (direct-conv/im2col form) + bias + ReLU.

    x_ref: (N*Cin, H*W)       raw input, rows = (n, ic), cols = (i, j)
    e_ref: (H*W, Hp_tot*Wp)   constant 0/1 scatter matrix: zero-insertion
                              (stride) + edge padding, flattened per image
    w_ref: (Cout, KH*KW*Cin)  spatially flipped kernel, cols ordered (kh,kw,ic)
    b_ref: (Cout, 1)          bias
    o_ref: (N*Cout, Lwp)      lane-dense output, rows = (n, oc); per row the
                              first Hout*Wp lanes are the "wide" flattened
                              output (valid cols 0..Wout-1 of each Wp-long row)
    """
    xv = x_ref[...]
    e = e_ref[...]
    w = w_ref[...]
    b = b_ref[...]

    # (1) zero-insertion + edge padding for all (n, ic) at once: one scatter
    #     matmul against the 0/1 matrix E (exact with HIGHEST precision).
    xp = jnp.dot(xv, e, preferred_element_type=jnp.float32,
                 precision=jax.lax.Precision.HIGHEST)          # (N*Cin, FL)

    # (2) im2col patch kept entirely in vregs: per tap (kh, kw) take one
    #     contiguous (Cin, Lw) lane-slice per image (wide-row trick: the KW-1
    #     extra cols per output row become garbage lanes never read back) and
    #     lane-pad each image block to Lwp (multiple of 128).
    pad = lwp - lw
    zpad = jnp.zeros((cin, pad), jnp.float32) if pad > 0 else None
    rows = []
    for kh in range(kh_sz):
        for kw in range(kw_sz):
            s = kh * wp + kw
            pieces = []
            for n in range(n_batch):
                pieces.append(xp[n * cin:(n + 1) * cin, s:s + lw])
                if pad > 0:
                    pieces.append(zpad)
            rows.append(pieces[0] if len(pieces) == 1
                        else jnp.concatenate(pieces, axis=1))  # (Cin, N*Lwp)
    patch = jnp.concatenate(rows, axis=0)                      # (KH*KW*Cin, N*Lwp)

    # (3) ONE MXU matmul for the whole batch, one bias add, one ReLU.
    y = jnp.dot(w, patch, preferred_element_type=jnp.float32,
                precision=jax.lax.Precision.HIGHEST)           # (Cout, N*Lwp)
    y = jnp.maximum(y + b, 0.0)

    # (4) reorder rows to (n, oc) and store once, fully lane-dense.
    if n_batch > 1:
        y = jnp.concatenate(
            [y[:, n * lwp:(n + 1) * lwp] for n in range(n_batch)], axis=0)
    o_ref[...] = y.astype(o_ref.dtype)                         # (N*Cout, Lwp)


def conv_transpose2d_relu(x, weight, bias, stride=(2, 2), padding=(0, 2)):
    """ConvTranspose2d + ReLU.  x: (N, Cin, H, W); weight: (Cin, Cout, KH, KW)."""
    N, Cin, H, W = x.shape
    cin_w, Cout, KH, KW = weight.shape
    assert cin_w == Cin
    sH, sW = stride
    pH, pW = padding
    # Direct-conv rewrite assumes padding <= K-1 (true for this module).
    assert 0 <= pH <= KH - 1 and 0 <= pW <= KW - 1
    # TODO(synk): output_padding / dilation / groups not handled (module uses defaults).

    Hout = (H - 1) * sH - 2 * pH + KH
    Wout = (W - 1) * sW - 2 * pW + KW

    # Transposed conv == stride-1 conv of the flipped kernel over the
    # zero-inserted, edge-padded input.
    ph, pw = KH - 1 - pH, KW - 1 - pW
    Hp = (H - 1) * sH + 1 + 2 * ph               # padded height
    Wp = (W - 1) * sW + 1 + 2 * pw               # padded width == Wout + KW - 1
    Lw = Hout * Wp                               # "wide" flattened output length
    max_off = (KH - 1) * Wp + (KW - 1)           # largest tap offset
    extra_rows = -(-max(0, max_off + Lw - Hp * Wp) // Wp)   # halo rows for in-bounds slices
    Hp_tot = Hp + extra_rows
    FL = Hp_tot * Wp
    Lwp = ((Lw + 127) // 128) * 128              # lane-padded per-image output width

    # Constant 0/1 scatter matrix: (i, j) -> (ph + sH*i)*Wp + pw + sW*j.
    E_np = np.zeros((H * W, FL), dtype=np.float32)
    for i in range(H):
        for j in range(W):
            E_np[i * W + j, (ph + sH * i) * Wp + (pw + sW * j)] = 1.0

    # Metadata-only reshape of the input; tiny (108-float) weight flip on host.
    xf = x.reshape(N * Cin, H * W).astype(jnp.float32)
    w2 = jnp.transpose(weight[:, :, ::-1, ::-1], (1, 2, 3, 0)).reshape(
        Cout, KH * KW * Cin).astype(jnp.float32)
    b2 = bias.reshape(Cout, 1).astype(jnp.float32)

    kernel = functools.partial(
        _convt_relu_kernel, n_batch=N, cin=Cin, kh_sz=KH, kw_sz=KW,
        wp=Wp, lw=Lw, lwp=Lwp)

    flops = 2 * (N * Cin) * (H * W) * FL + 2 * Cout * (KH * KW * Cin) * (N * Lwp)
    bytes_accessed = 4 * (N * Cin * H * W + (H * W) * FL
                          + Cout * KH * KW * Cin + Cout + N * Cout * Lwp)

    y_flat = pl.pallas_call(
        kernel,
        out_shape=jax.ShapeDtypeStruct((N * Cout, Lwp), jnp.float32),
        grid=(1,),                                   # single step: whole batch at once
        in_specs=[
            pl.BlockSpec((N * Cin, H * W), lambda i: (0, 0)),
            pl.BlockSpec((H * W, FL), lambda i: (0, 0)),
            pl.BlockSpec((Cout, KH * KW * Cin), lambda i: (0, 0)),
            pl.BlockSpec((Cout, 1), lambda i: (0, 0)),
        ],
        out_specs=pl.BlockSpec((N * Cout, Lwp), lambda i: (0, 0)),
        compiler_params=pltpu.CompilerParams(dimension_semantics=("arbitrary",)),
        cost_estimate=pl.CostEstimate(flops=flops, transcendentals=0,
                                      bytes_accessed=bytes_accessed),
    )(xf, jnp.asarray(E_np), w2, b2)

    # Drop lane padding + the KW-1 garbage columns of each wide row; the result
    # is already NCHW-ordered, no transpose.
    y = y_flat.reshape(N, Cout, Lwp)[:, :, :Lw]
    return y.reshape(N, Cout, Hout, Wp)[:, :, :, :Wout].astype(x.dtype)


def ref_conv_transpose2d_relu(x, w, b, stride=(2, 2), padding=(0, 2)):
    """Independent NumPy reference (scatter formulation of ConvTranspose2d)."""
    x, w, b = np.asarray(x), np.asarray(w), np.asarray(b)
    N, Cin, H, W = x.shape
    _, Cout, KH, KW = w.shape
    sH, sW = stride
    pH, pW = padding
    Hfull = (H - 1) * sH + KH
    Wfull = (W - 1) * sW + KW
    full = np.zeros((N, Cout, Hfull, Wfull), dtype=np.float64)
    for n in range(N):
        for ic in range(Cin):
            for ih in range(H):
                for iw in range(W):
                    full[n, :, ih * sH:ih * sH + KH, iw * sW:iw * sW + KW] += (
                        x[n, ic, ih, iw] * w[ic])
    Hout = Hfull - 2 * pH
    Wout = Wfull - 2 * pW
    out = full[:, :, pH:pH + Hout, pW:pW + Wout] + b[None, :, None, None]
    return np.maximum(out, 0.0)


if __name__ == "__main__":
    key = jax.random.PRNGKey(0)
    kx, kw_, kb = jax.random.split(key, 3)

    # small shapes consistent with the module: batch=2, Cin=3, 6x6 spatial
    x1 = jax.random.normal(kx, (2, 3, 6, 6), dtype=jnp.float32)
    # ConvTranspose2d(3, 4, (3,3)): weight (Cin, Cout, KH, KW), bias (Cout,)
    weight = jax.random.normal(kw_, (3, 4, 3, 3), dtype=jnp.float32) * 0.1
    bias = jax.random.normal(kb, (4,), dtype=jnp.float32) * 0.1

    out = jax.jit(conv_transpose2d_relu)(x1, weight, bias)
    out = jax.block_until_ready(out)

    ref = ref_conv_transpose2d_relu(x1, weight, bias)
    assert out.shape == ref.shape == (2, 4, 13, 9), (out.shape, ref.shape)
    err = float(np.max(np.abs(np.asarray(out, dtype=np.float64) - ref)))
    assert np.allclose(np.asarray(out), ref, atol=1e-2, rtol=1e-2), err

    print("KERNEL_OK")
</pallas_src>

<mosaic_0001>
module attributes {stable_mosaic.version = 11 : i64} {
  func.func @_convt_relu_kernel(%arg0: i32, %arg1: memref<6x36xf32, #tpu.memory_space<vmem>>, %arg2: memref<36x176xf32, #tpu.memory_space<vmem>>, %arg3: memref<4x27xf32, #tpu.memory_space<vmem>>, %arg4: memref<4x1xf32, #tpu.memory_space<vmem>>, %arg5: memref<8x256xf32, #tpu.memory_space<vmem>>) attributes {dimension_semantics = [#tpu.dimension_semantics<arbitrary>], iteration_bounds = array<i64: 1>, scalar_prefetch = 0 : i64, scratch_operands = 0 : i64, tpu.core_type = #tpu.core_type<tc>, window_params = [{pipeline_mode = #tpu.pipeline_mode<synchronous>, transform_indices = @transform_0, window_bounds = array<i64: 6, 36>}, {pipeline_mode = #tpu.pipeline_mode<synchronous>, transform_indices = @transform_1, window_bounds = array<i64: 36, 176>}, {pipeline_mode = #tpu.pipeline_mode<synchronous>, transform_indices = @transform_2, window_bounds = array<i64: 4, 27>}, {pipeline_mode = #tpu.pipeline_mode<synchronous>, transform_indices = @transform_3, window_bounds = array<i64: 4, 1>}, {pipeline_mode = #tpu.pipeline_mode<synchronous>, transform_indices = @transform_4, window_bounds = array<i64: 8, 256>}]} {
    %c0 = arith.constant 0 : index
    %c0_0 = arith.constant 0 : index
    %0 = vector.load %arg1[%c0, %c0_0] : memref<6x36xf32, #tpu.memory_space<vmem>>, vector<6x36xf32>
    %c0_1 = arith.constant 0 : index
    %c0_2 = arith.constant 0 : index
    %1 = vector.load %arg2[%c0_1, %c0_2] : memref<36x176xf32, #tpu.memory_space<vmem>>, vector<36x176xf32>
    %c0_3 = arith.constant 0 : index
    %c0_4 = arith.constant 0 : index
    %2 = vector.load %arg3[%c0_3, %c0_4] : memref<4x27xf32, #tpu.memory_space<vmem>>, vector<4x27xf32>
    %c0_5 = arith.constant 0 : index
    %c0_6 = arith.constant 0 : index
    %3 = vector.load %arg4[%c0_5, %c0_6] : memref<4x1xf32, #tpu.memory_space<vmem>>, vector<4x1xf32>
    %cst = arith.constant dense<0.000000e+00> : vector<6x176xf32>
    %4 = tpu.matmul %0, %1, %cst {dimension_numbers = #tpu.dot_dimension_numbers<[1], [0], [0], [1], [0, 0, 1, 1], [], []>, precision = #tpu.contract_precision<fp32>} : vector<6x36xf32>, vector<36x176xf32>, vector<6x176xf32> -> vector<6x176xf32>
    %cst_7 = arith.constant 0.000000e+00 : f32
    %5 = vector.broadcast %cst_7 : f32 to vector<3x113xf32>
    %6 = vector.extract_strided_slice %4 {offsets = [0, 0], sizes = [3, 143], strides = [1, 1]} : vector<6x176xf32> to vector<3x143xf32>
    %7 = vector.extract_strided_slice %4 {offsets = [3, 0], sizes = [3, 143], strides = [1, 1]} : vector<6x176xf32> to vector<3x143xf32>
    %8 = tpu.concatenate %6, %5, %7, %5 in 1 : vector<3x143xf32>, vector<3x113xf32>, vector<3x143xf32>, vector<3x113xf32> -> vector<3x512xf32>
    %9 = vector.extract_strided_slice %4 {offsets = [0, 1], sizes = [3, 143], strides = [1, 1]} : vector<6x176xf32> to vector<3x143xf32>
    %10 = vector.extract_strided_slice %4 {offsets = [3, 1], sizes = [3, 143], strides = [1, 1]} : vector<6x176xf32> to vector<3x143xf32>
    %11 = tpu.concatenate %9, %5, %10, %5 in 1 : vector<3x143xf32>, vector<3x113xf32>, vector<3x143xf32>, vector<3x113xf32> -> vector<3x512xf32>
    %12 = vector.extract_strided_slice %4 {offsets = [0, 2], sizes = [3, 143], strides = [1, 1]} : vector<6x176xf32> to vector<3x143xf32>
    %13 = vector.extract_strided_slice %4 {offsets = [3, 2], sizes = [3, 143], strides = [1, 1]} : vector<6x176xf32> to vector<3x143xf32>
    %14 = tpu.concatenate %12, %5, %13, %5 in 1 : vector<3x143xf32>, vector<3x113xf32>, vector<3x143xf32>, vector<3x113xf32> -> vector<3x512xf32>
    %15 = vector.extract_strided_slice %4 {offsets = [0, 11], sizes = [3, 143], strides = [1, 1]} : vector<6x176xf32> to vector<3x143xf32>
    %16 = vector.extract_strided_slice %4 {offsets = [3, 11], sizes = [3, 143], strides = [1, 1]} : vector<6x176xf32> to vector<3x143xf32>
    %17 = tpu.concatenate %15, %5, %16, %5 in 1 : vector<3x143xf32>, vector<3x113xf32>, vector<3x143xf32>, vector<3x113xf32> -> vector<3x512xf32>
    %18 = vector.extract_strided_slice %4 {offsets = [0, 12], sizes = [3, 143], strides = [1, 1]} : vector<6x176xf32> to vector<3x143xf32>
    %19 = vector.extract_strided_slice %4 {offsets = [3, 12], sizes = [3, 143], strides = [1, 1]} : vector<6x176xf32> to vector<3x143xf32>
    %20 = tpu.concatenate %18, %5, %19, %5 in 1 : vector<3x143xf32>, vector<3x113xf32>, vector<3x143xf32>, vector<3x113xf32> -> vector<3x512xf32>
    %21 = vector.extract_strided_slice %4 {offsets = [0, 13], sizes = [3, 143], strides = [1, 1]} : vector<6x176xf32> to vector<3x143xf32>
    %22 = vector.extract_strided_slice %4 {offsets = [3, 13], sizes = [3, 143], strides = [1, 1]} : vector<6x176xf32> to vector<3x143xf32>
    %23 = tpu.concatenate %21, %5, %22, %5 in 1 : vector<3x143xf32>, vector<3x113xf32>, vector<3x143xf32>, vector<3x113xf32> -> vector<3x512xf32>
    %24 = vector.extract_strided_slice %4 {offsets = [0, 22], sizes = [3, 143], strides = [1, 1]} : vector<6x176xf32> to vector<3x143xf32>
    %25 = vector.extract_strided_slice %4 {offsets = [3, 22], sizes = [3, 143], strides = [1, 1]} : vector<6x176xf32> to vector<3x143xf32>
    %26 = tpu.concatenate %24, %5, %25, %5 in 1 : vector<3x143xf32>, vector<3x113xf32>, vector<3x143xf32>, vector<3x113xf32> -> vector<3x512xf32>
    %27 = vector.extract_strided_slice %4 {offsets = [0, 23], sizes = [3, 143], strides = [1, 1]} : vector<6x176xf32> to vector<3x143xf32>
    %28 = vector.extract_strided_slice %4 {offsets = [3, 23], sizes = [3, 143], strides = [1, 1]} : vector<6x176xf32> to vector<3x143xf32>
    %29 = tpu.concatenate %27, %5, %28, %5 in 1 : vector<3x143xf32>, vector<3x113xf32>, vector<3x143xf32>, vector<3x113xf32> -> vector<3x512xf32>
    %30 = vector.extract_strided_slice %4 {offsets = [0, 24], sizes = [3, 143], strides = [1, 1]} : vector<6x176xf32> to vector<3x143xf32>
    %31 = vector.extract_strided_slice %4 {offsets = [3, 24], sizes = [3, 143], strides = [1, 1]} : vector<6x176xf32> to vector<3x143xf32>
    %32 = tpu.concatenate %30, %5, %31, %5 in 1 : vector<3x143xf32>, vector<3x113xf32>, vector<3x143xf32>, vector<3x113xf32> -> vector<3x512xf32>
    %33 = tpu.concatenate %8, %11, %14, %17, %20, %23, %26, %29, %32 in 0 : vector<3x512xf32>, vector<3x512xf32>, vector<3x512xf32>, vector<3x512xf32>, vector<3x512xf32>, vector<3x512xf32>, vector<3x512xf32>, vector<3x512xf32>, vector<3x512xf32> -> vector<27x512xf32>
    %cst_8 = arith.constant dense<0.000000e+00> : vector<4x512xf32>
    %34 = tpu.matmul %2, %33, %cst_8 {dimension_numbers = #tpu.dot_dimension_numbers<[1], [0], [0], [1], [0, 0, 1, 1], [], []>, precision = #tpu.contract_precision<fp32>} : vector<4x27xf32>, vector<27x512xf32>, vector<4x512xf32> -> vector<4x512xf32>
    %35 = vector.broadcast %3 : vector<4x1xf32> to vector<4x512xf32>
    %36 = arith.addf %34, %35 : vector<4x512xf32>
    %cst_9 = arith.constant 0.000000e+00 : f32
    %37 = vector.broadcast %cst_9 : f32 to vector<4x512xf32>
    %38 = arith.maximumf %36, %37 : vector<4x512xf32>
    %39 = vector.extract_strided_slice %38 {offsets = [0, 0], sizes = [4, 256], strides = [1, 1]} : vector<4x512xf32> to vector<4x256xf32>
    %40 = vector.extract_strided_slice %38 {offsets = [0, 256], sizes = [4, 256], strides = [1, 1]} : vector<4x512xf32> to vector<4x256xf32>
    %41 = tpu.concatenate %39, %40 in 0 : vector<4x256xf32>, vector<4x256xf32> -> vector<8x256xf32>
    %c0_10 = arith.constant 0 : index
    %c0_11 = arith.constant 0 : index
    %42 = vector.load %arg5[%c0_10, %c0_11] : memref<8x256xf32, #tpu.memory_space<vmem>>, vector<8x256xf32>
    tpu.vector_store %arg5[%c0_10, %c0_11], %41 {strides = array<i32>} : memref<8x256xf32, #tpu.memory_space<vmem>>, vector<8x256xf32>,
    return
  }
  func.func @transform_0(%arg0: i32) -> (i32, i32) {
    %c0_i32 = arith.constant 0 : i32
    %c0_i32_0 = arith.constant 0 : i32
    %c0_i32_1 = arith.constant 0 : i32
    return %c0_i32, %c0_i32_0 : i32, i32
  }
  func.func @transform_1(%arg0: i32) -> (i32, i32) {
    %c0_i32 = arith.constant 0 : i32
    %c0_i32_0 = arith.constant 0 : i32
    %c0_i32_1 = arith.constant 0 : i32
    return %c0_i32, %c0_i32_0 : i32, i32
  }
  func.func @transform_2(%arg0: i32) -> (i32, i32) {
    %c0_i32 = arith.constant 0 : i32
    %c0_i32_0 = arith.constant 0 : i32
    %c0_i32_1 = arith.constant 0 : i32
    return %c0_i32, %c0_i32_0 : i32, i32
  }
  func.func @transform_3(%arg0: i32) -> (i32, i32) {
    %c0_i32 = arith.constant 0 : i32
    %c0_i32_0 = arith.constant 0 : i32
    %c0_i32_1 = arith.constant 0 : i32
    return %c0_i32, %c0_i32_0 : i32, i32
  }
  func.func @transform_4(%arg0: i32) -> (i32, i32) {
    %c0_i32 = arith.constant 0 : i32
    %c0_i32_0 = arith.constant 0 : i32
    %c0_i32_1 = arith.constant 0 : i32
    return %c0_i32, %c0_i32_0 : i32, i32
  }
}

</mosaic_0001>

<llo_original>
// kernel: conv_transpose2d_relu.1
$region0: #{conv_transpose2d_relu.1}
  #allocation0 [shape = 'u32[]', space=smem, size = 0x4, offset = 0x4, fixed_abs, tag = 'smem constant byte address 0x4 - core index']
  #allocation1 [shape = 'u32[144,128]{1,0:T(1,128)}', space=vmem, size = 0x12000, scoped, tag = 'internal scratch']
  %s0 = inlined_call_operand.vmem [shape: f32[6,36], index: 0, kind: input, shape index: {}]
  %s1 = inlined_call_operand.vmem [shape: f32[36,176], index: 1, kind: input, shape index: {}]
  %s2 = inlined_call_operand.vmem [shape: f32[4,27], index: 2, kind: input, shape index: {}]
  %s3 = inlined_call_operand.vmem [shape: f32[4,1], index: 3, kind: input, shape index: {}]
  %s4 = inlined_call_operand.vmem [shape: f32[8,256], index: 4, kind: output, shape index: {}]
  %s5 = sld [smem:[#allocation0]]
  $region26: #{conv_transpose2d_relu.1} parent=0
    _
  %s7 = ssub.s32 1, %s5
  %s8 = scalar_select 0, %s7, %s5
  // Predicated region
  $region2: #{conv_transpose2d_relu.1} parent=0 // pred_check
    _
  $region3: #{conv_transpose2d_relu.1} parent=0 // pred_check_branch
    %10 = sbr.rel (0) target = $region5
  $region4: #{conv_transpose2d_relu.1} parent=0 // pred_region
    _
  $region5: #{conv_transpose2d_relu.1} parent=0 // pred_fallthru
    _
  // Predicated region
  $region6: #{conv_transpose2d_relu.1} parent=0 // pred_check
    _
  $region7: #{conv_transpose2d_relu.1} parent=0 // pred_check_branch
    %12 = sbr.rel (0) target = $region9
  $region8: #{conv_transpose2d_relu.1} parent=0 // pred_region
    _
  $region9: #{conv_transpose2d_relu.1} parent=0 // pred_fallthru
    _
  // Predicated region
  $region10: #{conv_transpose2d_relu.1} parent=0 // pred_check
    _
  $region11: #{conv_transpose2d_relu.1} parent=0 // pred_check_branch
    %14 = sbr.rel (0) target = $region13
  $region12: #{conv_transpose2d_relu.1} parent=0 // pred_region
    _
  $region13: #{conv_transpose2d_relu.1} parent=0 // pred_fallthru
    _
  // Predicated region
  $region14: #{conv_transpose2d_relu.1} parent=0 // pred_check
    _
  $region15: #{conv_transpose2d_relu.1} parent=0 // pred_check_branch
    %16 = sbr.rel (0) target = $region17
  $region16: #{conv_transpose2d_relu.1} parent=0 // pred_region
    _
  $region17: #{conv_transpose2d_relu.1} parent=0 // pred_fallthru
    _
  %v17 = vld [vmem:[%s0] sm:$0x3f]
  %v18 = vld [vmem:[%s1] sm:$0xff]
  %v19 = vld [vmem:[%s1 + $0x8] sm:$0xff]
  %v20 = vld [vmem:[%s1 + $0x10] sm:$0xff]
  %v21 = vld [vmem:[%s1 + $0x18] sm:$0xff]
  %v22 = vld [vmem:[%s1 + $0x20] sm:$0xff]
  %v23 = vld [vmem:[%s1 + $0x28] sm:$0xff]
  %v24 = vld [vmem:[%s1 + $0x30] sm:$0xff]
  %v25 = vld [vmem:[%s1 + $0x38] sm:$0xff]
  %v26 = vld [vmem:[%s1 + $0x40] sm:$0xf]
  %v27 = vld [vmem:[%s1 + $0x48] sm:$0xf]
  %v28 = vld [vmem:[%s2] sm:$0xf]
  %v29 = vld [vmem:[%s3] sm:$0xf]
  %vm30 = vcmask 293888
  %v32 = vsel %vm30, %v17, 0
  %vm34 = vcmask 1043456
  %v36 = vsel %vm34, %v26, 0
  %v39 = vsel %vm34, %v27, 0
  %v41 = vand.u32 %v19, 4294901760
  %42 = vmatprep.subr.mxu0 %v41
  %v43 = vand.u32 %v18, 4294901760
  %44 = vmatpush1.msra.mxu0 %v43
  %v45 = vand.u32 %v21, 4294901760
  %46 = vmatprep.subr.mxu0 %v45
  %v47 = vand.u32 %v20, 4294901760
  %48 = vmatpush1.msra.mxu0 %v47
  %v49 = vand.u32 %v23, 4294901760
  %50 = vmatprep.subr.mxu0 %v49
  %v51 = vand.u32 %v22, 4294901760
  %52 = vmatpush1.msra.mxu0 %v51
  %v53 = vand.u32 %v25, 4294901760
  %54 = vmatprep.subr.mxu0 %v53
  %v55 = vand.u32 %v24, 4294901760
  %56 = vmatpush1.msra.mxu0 %v55
  %v57 = vand.u32 %v39, 4294901760
  %58 = vmatprep.subr.mxu0 %v57
  %v59 = vand.u32 %v36, 4294901760
  %60 = vmatpush1.msra.mxu0 %v59
  %61 = vmatprep.subr.mxu0 0.0
  %62 = vmatpush1.msra.mxu0 0.0
  %63 = vmatprep.subr.mxu0 0.0
  %64 = vmatpush1.msra.mxu0 0.0
  %65 = vmatprep.subr.mxu0 0.0
  %66 = vmatpush1.msra.mxu0 0.0
  %67 = vmatprep.subr.mxu0 0.0
  %68 = vmatpush1.msra.mxu0 0.0
  %69 = vmatprep.subr.mxu0 0.0
  %70 = vmatpush1.msra.mxu0 0.0
  %71 = vmatprep.subr.mxu0 0.0
  %72 = vmatpush1.msra.mxu0 0.0
  %73 = vmatprep.subr.mxu0 0.0
  %74 = vmatpush1.msra.mxu0 0.0
  %75 = vmatprep.subr.mxu0 0.0
  %76 = vmatpush1.msra.mxu0 0.0
  %77 = vmatprep.subr.mxu0 0.0
  %78 = vmatpush1.msra.mxu0 0.0
  %79 = vmatprep.subr.mxu0 0.0
  %80 = vmatpush1.msra.mxu0 0.0
  %81 = vmatprep.subr.mxu0 0.0
  %82 = vmatpush1.msra.mxu0 0.0
  %83 = vmatprep.subr.mxu0 0.0
  %84 = vmatpush1.msra.mxu0 0.0
  %85 = vmatprep.subr.mxu0 0.0
  %86 = vmatpush1.msra.mxu0 0.0
  %87 = vmatprep.subr.mxu0 0.0
  %88 = vmatpush1.msra.mxu0 0.0
  %89 = vmatprep.subr.mxu0 0.0
  %90 = vmatpush1.msra.mxu0 0.0
  %91 = vmatprep.subr.mxu0 0.0
  %92 = vmatpush1.msra.mxu0 0.0
  %93 = vmatprep.subr.mxu0 0.0
  %94 = vmatpush1.msra.mxu0 0.0
  %95 = vmatprep.subr.mxu0 0.0
  %96 = vmatpush1.msra.mxu0 0.0
  %97 = vmatprep.subr.mxu0 0.0
  %98 = vmatpush1.msra.mxu0 0.0
  %99 = vmatprep.subr.mxu0 0.0
  %100 = vmatpush1.msra.mxu0 0.0
  %101 = vmatprep.subr.mxu0 0.0
  %102 = vmatpush1.msra.mxu0 0.0
  %103 = vmatprep.subr.mxu0 0.0
  %104 = vmatpush1.msra.mxu0 0.0
  %105 = vmatprep.subr.mxu0 0.0
  %106 = vmatpush1.msra.mxu0 0.0
  %107 = vmatprep.subr.mxu0 0.0
  %108 = vmatpush1.msra.mxu0 0.0
  %109 = vmatprep.subr.mxu0 0.0
  %110 = vmatpush1.msra.mxu0 0.0
  %111 = vmatprep.subr.mxu0 0.0
  %112 = vmatpush1.msra.mxu0 0.0
  %113 = vmatprep.subr.mxu0 0.0
  %114 = vmatpush1.msra.mxu0 0.0
  %115 = vmatprep.mubr.f32.mxu0 0.0
  %v116 = vand.u32 %v32, 4294901760
  %v117 = vsub.f32 %v32, %v116
  %v118 = vand.u32 %v117, 4294901760
  %v119 = vsub.f32 %v117, %v118
  %v120 = vand.u32 %v119, 4294901760
  %121 = vmatmul.mubr.f32.gmra.mrb[0].mxu0 %v120
  %v122 = vpop.f32.mrb[0].mxu0
  %v123 = vadd.f32 0.0, %v122
  %v124 = vpop.f32.mrb[0].mxu0
  %v125 = vadd.f32 0.0, %v124
  %126 = vdwg.mxu0
  %v127 = vand.u32 %v19, 4294901760
  %v128 = vsub.f32 %v19, %v127
  %v129 = vand.u32 %v128, 4294901760
  %v130 = vsub.f32 %v128, %v129
  %v131 = vand.u32 %v130, 4294901760
  %132 = vmatprep.subr.mxu0 %v131
  %v133 = vand.u32 %v18, 4294901760
  %v134 = vsub.f32 %v18, %v133
  %v135 = vand.u32 %v134, 4294901760
  %v136 = vsub.f32 %v134, %v135
  %v137 = vand.u32 %v136, 4294901760
  %138 = vmatpush1.msra.mxu0 %v137
  %v139 = vand.u32 %v21, 4294901760
  %v140 = vsub.f32 %v21, %v139
  %v141 = vand.u32 %v140, 4294901760
  %v142 = vsub.f32 %v140, %v141
  %v143 = vand.u32 %v142, 4294901760
  %144 = vmatprep.subr.mxu0 %v143
  %v145 = vand.u32 %v20, 4294901760
  %v146 = vsub.f32 %v20, %v145
  %v147 = vand.u32 %v146, 4294901760
  %v148 = vsub.f32 %v146, %v147
  %v149 = vand.u32 %v148, 4294901760
  %150 = vmatpush1.msra.mxu0 %v149
  %v151 = vand.u32 %v23, 4294901760
  %v152 = vsub.f32 %v23, %v151
  %v153 = vand.u32 %v152, 4294901760
  %v154 = vsub.f32 %v152, %v153
  %v155 = vand.u32 %v154, 4294901760
  %156 = vmatprep.subr.mxu0 %v155
  %v157 = vand.u32 %v22, 4294901760
  %v158 = vsub.f32 %v22, %v157
  %v159 = vand.u32 %v158, 4294901760
  %v160 = vsub.f32 %v158, %v159
  %v161 = vand.u32 %v160, 4294901760
  %162 = vmatpush1.msra.mxu0 %v161
  %v163 = vand.u32 %v25, 4294901760
  %v164 = vsub.f32 %v25, %v163
  %v165 = vand.u32 %v164, 4294901760
  %v166 = vsub.f32 %v164, %v165
  %v167 = vand.u32 %v166, 4294901760
  %168 = vmatprep.subr.mxu0 %v167
  %v169 = vand.u32 %v24, 4294901760
  %v170 = vsub.f32 %v24, %v169
  %v171 = vand.u32 %v170, 4294901760
  %v172 = vsub.f32 %v170, %v171
  %v173 = vand.u32 %v172, 4294901760
  %174 = vmatpush1.msra.mxu0 %v173
  %v175 = vand.u32 %v39, 4294901760
  %v176 = vsub.f32 %v39, %v175
  %v177 = vand.u32 %v176, 4294901760
  %v178 = vsub.f32 %v176, %v177
  %v179 = vand.u32 %v178, 4294901760
  %180 = vmatprep.subr.mxu0 %v179
  %v181 = vand.u32 %v36, 4294901760
  %v182 = vsub.f32 %v36, %v181
  %v183 = vand.u32 %v182, 4294901760
  %v184 = vsub.f32 %v182, %v183
  %v185 = vand.u32 %v184, 4294901760
  %186 = vmatpush1.msra.mxu0 %v185
  %187 = vmatprep.subr.mxu0 0.0
  %188 = vmatpush1.msra.mxu0 0.0
  %189 = vmatprep.subr.mxu0 0.0
  %190 = vmatpush1.msra.mxu0 0.0
  %191 = vmatprep.subr.mxu0 0.0
  %192 = vmatpush1.msra.mxu0 0.0
  %193 = vmatprep.subr.mxu0 0.0
  %194 = vmatpush1.msra.mxu0 0.0
  %195 = vmatprep.subr.mxu0 0.0
  %196 = vmatpush1.msra.mxu0 0.0
  %197 = vmatprep.subr.mxu0 0.0
  %198 = vmatpush1.msra.mxu0 0.0
  %199 = vmatprep.subr.mxu0 0.0
  %200 = vmatpush1.msra.mxu0 0.0
  %201 = vmatprep.subr.mxu0 0.0
  %202 = vmatpush1.msra.mxu0 0.0
  %203 = vmatprep.subr.mxu0 0.0
  %204 = vmatpush1.msra.mxu0 0.0
  %205 = vmatprep.subr.mxu0 0.0
  %206 = vmatpush1.msra.mxu0 0.0
  %207 = vmatprep.subr.mxu0 0.0
  %208 = vmatpush1.msra.mxu0 0.0
  %209 = vmatprep.subr.mxu0 0.0
  %210 = vmatpush1.msra.mxu0 0.0
  %211 = vmatprep.subr.mxu0 0.0
  %212 = vmatpush1.msra.mxu0 0.0
  %213 = vmatprep.subr.mxu0 0.0
  %214 = vmatpush1.msra.mxu0 0.0
  %215 = vmatprep.subr.mxu0 0.0
  %216 = vmatpush1.msra.mxu0 0.0
  %217 = vmatprep.subr.mxu0 0.0
  %218 = vmatpush1.msra.mxu0 0.0
  %219 = vmatprep.subr.mxu0 0.0
  %220 = vmatpush1.msra.mxu0 0.0
  %221 = vmatprep.subr.mxu0 0.0
  %222 = vmatpush1.msra.mxu0 0.0
  %223 = vmatprep.subr.mxu0 0.0
  %224 = vmatpush1.msra.mxu0 0.0
  %225 = vmatprep.subr.mxu0 0.0
  %226 = vmatpush1.msra.mxu0 0.0
  %227 = vmatprep.subr.mxu0 0.0
  %228 = vmatpush1.msra.mxu0 0.0
  %229 = vmatprep.subr.mxu0 0.0
  %230 = vmatpush1.msra.mxu0 0.0
  %231 = vmatprep.subr.mxu0 0.0
  %232 = vmatpush1.msra.mxu0 0.0
  %233 = vmatprep.subr.mxu0 0.0
  %234 = vmatpush1.msra.mxu0 0.0
  %235 = vmatprep.subr.mxu0 0.0
  %236 = vmatpush1.msra.mxu0 0.0
  %237 = vmatprep.subr.mxu0 0.0
  %238 = vmatpush1.msra.mxu0 0.0
  %239 = vmatprep.subr.mxu0 0.0
  %240 = vmatpush1.msra.mxu0 0.0
  %241 = vmatprep.mubr.f32.mxu0 0.0
  %v242 = vand.u32 %v32, 4294901760
  %243 = vmatmul.mubr.f32.gmra.mrb[0].mxu0 %v242
  %v244 = vpop.f32.mrb[0].mxu0
  %v245 = vadd.f32 %v123, %v244
  %v246 = vpop.f32.mrb[0].mxu0
  %v247 = vadd.f32 %v125, %v246
  %248 = vdwg.mxu0
  %v249 = vand.u32 %v19, 4294901760
  %v250 = vsub.f32 %v19, %v249
  %251 = vmatprep.subr.mxu0 %v250
  %v252 = vand.u32 %v18, 4294901760
  %v253 = vsub.f32 %v18, %v252
  %254 = vmatpush1.msra.mxu0 %v253
  %v255 = vand.u32 %v21, 4294901760
  %v256 = vsub.f32 %v21, %v255
  %257 = vmatprep.subr.mxu0 %v256
  %v258 = vand.u32 %v20, 4294901760
  %v259 = vsub.f32 %v20, %v258
  %260 = vmatpush1.msra.mxu0 %v259
  %v261 = vand.u32 %v23, 4294901760
  %v262 = vsub.f32 %v23, %v261
  %263 = vmatprep.subr.mxu0 %v262
  %v264 = vand.u32 %v22, 4294901760
  %v265 = vsub.f32 %v22, %v264
  %266 = vmatpush1.msra.mxu0 %v265
  %v267 = vand.u32 %v25, 4294901760
  %v268 = vsub.f32 %v25, %v267
  %269 = vmatprep.subr.mxu0 %v268
  %v270 = vand.u32 %v24, 4294901760
  %v271 = vsub.f32 %v24, %v270
  %272 = vmatpush1.msra.mxu0 %v271
  %v273 = vand.u32 %v39, 4294901760
  %v274 = vsub.f32 %v39, %v273
  %275 = vmatprep.subr.mxu0 %v274
  %v276 = vand.u32 %v36, 4294901760
  %v277 = vsub.f32 %v36, %v276
  %278 = vmatpush1.msra.mxu0 %v277
  %279 = vmatprep.subr.mxu0 0.0
  %280 = vmatpush1.msra.mxu0 0.0
  %281 = vmatprep.subr.mxu0 0.0
  %282 = vmatpush1.msra.mxu0 0.0
  %283 = vmatprep.subr.mxu0 0.0
  %284 = vmatpush1.msra.mxu0 0.0
  %285 = vmatprep.subr.mxu0 0.0
  %286 = vmatpush1.msra.mxu0 0.0
  %287 = vmatprep.subr.mxu0 0.0
  %288 = vmatpush1.msra.mxu0 0.0
  %289 = vmatprep.subr.mxu0 0.0
  %290 = vmatpush1.msra.mxu0 0.0
  %291 = vmatprep.subr.mxu0 0.0
  %292 = vmatpush1.msra.mxu0 0.0
  %293 = vmatprep.subr.mxu0 0.0
  %294 = vmatpush1.msra.mxu0 0.0
  %295 = vmatprep.subr.mxu0 0.0
  %296 = vmatpush1.msra.mxu0 0.0
  %297 = vmatprep.subr.mxu0 0.0
  %298 = vmatpush1.msra.mxu0 0.0
  %299 = vmatprep.subr.mxu0 0.0
  %300 = vmatpush1.msra.mxu0 0.0
  %301 = vmatprep.subr.mxu0 0.0
  %302 = vmatpush1.msra.mxu0 0.0
  %303 = vmatprep.subr.mxu0 0.0
  %304 = vmatpush1.msra.mxu0 0.0
  %305 = vmatprep.subr.mxu0 0.0
  %306 = vmatpush1.msra.mxu0 0.0
  %307 = vmatprep.subr.mxu0 0.0
  %308 = vmatpush1.msra.mxu0 0.0
  %309 = vmatprep.subr.mxu0 0.0
  %310 = vmatpush1.msra.mxu0 0.0
  %311 = vmatprep.subr.mxu0 0.0
  %312 = vmatpush1.msra.mxu0 0.0
  %313 = vmatprep.subr.mxu0 0.0
  %314 = vmatpush1.msra.mxu0 0.0
  %315 = vmatprep.subr.mxu0 0.0
  %316 = vmatpush1.msra.mxu0 0.0
  %317 = vmatprep.subr.mxu0 0.0
  %318 = vmatpush1.msra.mxu0 0.0
  %319 = vmatprep.subr.mxu0 0.0
  %320 = vmatpush1.msra.mxu0 0.0
  %321 = vmatprep.subr.mxu0 0.0
  %322 = vmatpush1.msra.mxu0 0.0
  %323 = vmatprep.subr.mxu0 0.0
  %324 = vmatpush1.msra.mxu0 0.0
  %325 = vmatprep.subr.mxu0 0.0
  %326 = vmatpush1.msra.mxu0 0.0
  %327 = vmatprep.subr.mxu0 0.0
  %328 = vmatpush1.msra.mxu0 0.0
  %329 = vmatprep.subr.mxu0 0.0
  %330 = vmatpush1.msra.mxu0 0.0
  %331 = vmatprep.subr.mxu0 0.0
  %332 = vmatpush1.msra.mxu0 0.0
  %333 = vmatprep.mubr.f32.mxu0 0.0
  %v334 = vand.u32 %v32, 4294901760
  %v335 = vsub.f32 %v32, %v334
  %336 = vmatmul.mubr.f32.gmra.mrb[0].mxu0 %v335
  %v337 = vpop.f32.mrb[0].mxu0
  %v338 = vadd.f32 %v245, %v337
  %v339 = vpop.f32.mrb[0].mxu0
  %v340 = vadd.f32 %v247, %v339
  %341 = vdwg.mxu0
  %v342 = vand.u32 %v19, 4294901760
  %343 = vmatprep.subr.mxu0 %v342
  %v344 = vand.u32 %v18, 4294901760
  %345 = vmatpush1.msra.mxu0 %v344
  %v346 = vand.u32 %v21, 4294901760
  %347 = vmatprep.subr.mxu0 %v346
  %v348 = vand.u32 %v20, 4294901760
  %349 = vmatpush1.msra.mxu0 %v348
  %v350 = vand.u32 %v23, 4294901760
  %351 = vmatprep.subr.mxu0 %v350
  %v352 = vand.u32 %v22, 4294901760
  %353 = vmatpush1.msra.mxu0 %v352
  %v354 = vand.u32 %v25, 4294901760
  %355 = vmatprep.subr.mxu0 %v354
  %v356 = vand.u32 %v24, 4294901760
  %357 = vmatpush1.msra.mxu0 %v356
  %v358 = vand.u32 %v39, 4294901760
  %359 = vmatprep.subr.mxu0 %v358
  %v360 = vand.u32 %v36, 4294901760
  %361 = vmatpush1.msra.mxu0 %v360
  %362 = vmatprep.subr.mxu0 0.0
  %363 = vmatpush1.msra.mxu0 0.0
  %364 = vmatprep.subr.mxu0 0.0
  %365 = vmatpush1.msra.mxu0 0.0
  %366 = vmatprep.subr.mxu0 0.0
  %367 = vmatpush1.msra.mxu0 0.0
  %368 = vmatprep.subr.mxu0 0.0
  %369 = vmatpush1.msra.mxu0 0.0
  %370 = vmatprep.subr.mxu0 0.0
  %371 = vmatpush1.msra.mxu0 0.0
  %372 = vmatprep.subr.mxu0 0.0
  %373 = vmatpush1.msra.mxu0 0.0
  %374 = vmatprep.subr.mxu0 0.0
  %375 = vmatpush1.msra.mxu0 0.0
  %376 = vmatprep.subr.mxu0 0.0
  %377 = vmatpush1.msra.mxu0 0.0
  %378 = vmatprep.subr.mxu0 0.0
  %379 = vmatpush1.msra.mxu0 0.0
  %380 = vmatprep.subr.mxu0 0.0
  %381 = vmatpush1.msra.mxu0 0.0
  %382 = vmatprep.subr.mxu0 0.0
  %383 = vmatpush1.msra.mxu0 0.0
  %384 = vmatprep.subr.mxu0 0.0
  %385 = vmatpush1.msra.mxu0 0.0
  %386 = vmatprep.subr.mxu0 0.0
  %387 = vmatpush1.msra.mxu0 0.0
  %388 = vmatprep.subr.mxu0 0.0
  %389 = vmatpush1.msra.mxu0 0.0
  %390 = vmatprep.subr.mxu0 0.0
  %391 = vmatpush1.msra.mxu0 0.0
  %392 = vmatprep.subr.mxu0 0.0
  %393 = vmatpush1.msra.mxu0 0.0
  %394 = vmatprep.subr.mxu0 0.0
  %395 = vmatpush1.msra.mxu0 0.0
  %396 = vmatprep.subr.mxu0 0.0
  %397 = vmatpush1.msra.mxu0 0.0
  %398 = vmatprep.subr.mxu0 0.0
  %399 = vmatpush1.msra.mxu0 0.0
  %400 = vmatprep.subr.mxu0 0.0
  %401 = vmatpush1.msra.mxu0 0.0
  %402 = vmatprep.subr.mxu0 0.0
  %403 = vmatpush1.msra.mxu0 0.0
  %404 = vmatprep.subr.mxu0 0.0
  %405 = vmatpush1.msra.mxu0 0.0
  %406 = vmatprep.subr.mxu0 0.0
  %407 = vmatpush1.msra.mxu0 0.0
  %408 = vmatprep.subr.mxu0 0.0
  %409 = vmatpush1.msra.mxu0 0.0
  %410 = vmatprep.subr.mxu0 0.0
  %411 = vmatpush1.msra.mxu0 0.0
  %412 = vmatprep.subr.mxu0 0.0
  %413 = vmatpush1.msra.mxu0 0.0
  %414 = vmatprep.subr.mxu0 0.0
  %415 = vmatpush1.msra.mxu0 0.0
  %416 = vmatprep.mubr.f32.mxu0 0.0
  %v417 = vand.u32 %v32, 4294901760
  %v418 = vsub.f32 %v32, %v417
  %v419 = vand.u32 %v418, 4294901760
  %420 = vmatmul.mubr.f32.gmra.mrb[0].mxu0 %v419
  %v421 = vpop.f32.mrb[0].mxu0
  %v422 = vadd.f32 %v338, %v421
  %v423 = vpop.f32.mrb[0].mxu0
  %v424 = vadd.f32 %v340, %v423
  %425 = vdwg.mxu0
  %v426 = vand.u32 %v19, 4294901760
  %v427 = vsub.f32 %v19, %v426
  %v428 = vand.u32 %v427, 4294901760
  %429 = vmatprep.subr.mxu0 %v428
  %v430 = vand.u32 %v18, 4294901760
  %v431 = vsub.f32 %v18, %v430
  %v432 = vand.u32 %v431, 4294901760
  %433 = vmatpush1.msra.mxu0 %v432
  %v434 = vand.u32 %v21, 4294901760
  %v435 = vsub.f32 %v21, %v434
  %v436 = vand.u32 %v435, 4294901760
  %437 = vmatprep.subr.mxu0 %v436
  %v438 = vand.u32 %v20, 4294901760
  %v439 = vsub.f32 %v20, %v438
  %v440 = vand.u32 %v439, 4294901760
  %441 = vmatpush1.msra.mxu0 %v440
  %v442 = vand.u32 %v23, 4294901760
  %v443 = vsub.f32 %v23, %v442
  %v444 = vand.u32 %v443, 4294901760
  %445 = vmatprep.subr.mxu0 %v444
  %v446 = vand.u32 %v22, 4294901760
  %v447 = vsub.f32 %v22, %v446
  %v448 = vand.u32 %v447, 4294901760
  %449 = vmatpush1.msra.mxu0 %v448
  %v450 = vand.u32 %v25, 4294901760
  %v451 = vsub.f32 %v25, %v450
  %v452 = vand.u32 %v451, 4294901760
  %453 = vmatprep.subr.mxu0 %v452
  %v454 = vand.u32 %v24, 4294901760
  %v455 = vsub.f32 %v24, %v454
  %v456 = vand.u32 %v455, 4294901760
  %457 = vmatpush1.msra.mxu0 %v456
  %v458 = vand.u32 %v39, 4294901760
  %v459 = vsub.f32 %v39, %v458
  %v460 = vand.u32 %v459, 4294901760
  %461 = vmatprep.subr.mxu0 %v460
  %v462 = vand.u32 %v36, 4294901760
  %v463 = vsub.f32 %v36, %v462
  %v464 = vand.u32 %v463, 4294901760
  %465 = vmatpush1.msra.mxu0 %v464
  %466 = vmatprep.subr.mxu0 0.0
  %467 = vmatpush1.msra.mxu0 0.0
  %468 = vmatprep.subr.mxu0 0.0
  %469 = vmatpush1.msra.mxu0 0.0
  %470 = vmatprep.subr.mxu0 0.0
  %471 = vmatpush1.msra.mxu0 0.0
  %472 = vmatprep.subr.mxu0 0.0
  %473 = vmatpush1.msra.mxu0 0.0
  %474 = vmatprep.subr.mxu0 0.0
  %475 = vmatpush1.msra.mxu0 0.0
  %476 = vmatprep.subr.mxu0 0.0
  %477 = vmatpush1.msra.mxu0 0.0
  %478 = vmatprep.subr.mxu0 0.0
  %479 = vmatpush1.msra.mxu0 0.0
  %480 = vmatprep.subr.mxu0 0.0
  %481 = vmatpush1.msra.mxu0 0.0
  %482 = vmatprep.subr.mxu0 0.0
  %483 = vmatpush1.msra.mxu0 0.0
  %484 = vmatprep.subr.mxu0 0.0
  %485 = vmatpush1.msra.mxu0 0.0
  %486 = vmatprep.subr.mxu0 0.0
  %487 = vmatpush1.msra.mxu0 0.0
  %488 = vmatprep.subr.mxu0 0.0
  %489 = vmatpush1.msra.mxu0 0.0
  %490 = vmatprep.subr.mxu0 0.0
  %491 = vmatpush1.msra.mxu0 0.0
  %492 = vmatprep.subr.mxu0 0.0
  %493 = vmatpush1.msra.mxu0 0.0
  %494 = vmatprep.subr.mxu0 0.0
  %495 = vmatpush1.msra.mxu0 0.0
  %496 = vmatprep.subr.mxu0 0.0
  %497 = vmatpush1.msra.mxu0 0.0
  %498 = vmatprep.subr.mxu0 0.0
  %499 = vmatpush1.msra.mxu0 0.0
  %500 = vmatprep.subr.mxu0 0.0
  %501 = vmatpush1.msra.mxu0 0.0
  %502 = vmatprep.subr.mxu0 0.0
  %503 = vmatpush1.msra.mxu0 0.0
  %504 = vmatprep.subr.mxu0 0.0
  %505 = vmatpush1.msra.mxu0 0.0
  %506 = vmatprep.subr.mxu0 0.0
  %507 = vmatpush1.msra.mxu0 0.0
  %508 = vmatprep.subr.mxu0 0.0
  %509 = vmatpush1.msra.mxu0 0.0
  %510 = vmatprep.subr.mxu0 0.0
  %511 = vmatpush1.msra.mxu0 0.0
  %512 = vmatprep.subr.mxu0 0.0
  %513 = vmatpush1.msra.mxu0 0.0
  %514 = vmatprep.subr.mxu0 0.0
  %515 = vmatpush1.msra.mxu0 0.0
  %516 = vmatprep.subr.mxu0 0.0
  %517 = vmatpush1.msra.mxu0 0.0
  %518 = vmatprep.subr.mxu0 0.0
  %519 = vmatpush1.msra.mxu0 0.0
  %520 = vmatprep.mubr.f32.mxu0 0.0
  %v521 = vand.u32 %v32, 4294901760
  %522 = vmatmul.mubr.f32.gmra.mrb[0].mxu0 %v521
  %v523 = vpop.f32.mrb[0].mxu0
  %v524 = vadd.f32 %v422, %v523
  %v525 = vpop.f32.mrb[0].mxu0
  %v526 = vadd.f32 %v424, %v525
  %527 = vdwg.mxu0
  %v528 = vand.u32 %v19, 4294901760
  %529 = vmatprep.subr.mxu0 %v528
  %v530 = vand.u32 %v18, 4294901760
  %531 = vmatpush1.msra.mxu0 %v530
  %v532 = vand.u32 %v21, 4294901760
  %533 = vmatprep.subr.mxu0 %v532
  %v534 = vand.u32 %v20, 4294901760
  %535 = vmatpush1.msra.mxu0 %v534
  %v536 = vand.u32 %v23, 4294901760
  %537 = vmatprep.subr.mxu0 %v536
  %v538 = vand.u32 %v22, 4294901760
  %539 = vmatpush1.msra.mxu0 %v538
  %v540 = vand.u32 %v25, 4294901760
  %541 = vmatprep.subr.mxu0 %v540
  %v542 = vand.u32 %v24, 4294901760
  %543 = vmatpush1.msra.mxu0 %v542
  %v544 = vand.u32 %v39, 4294901760
  %545 = vmatprep.subr.mxu0 %v544
  %v546 = vand.u32 %v36, 4294901760
  %547 = vmatpush1.msra.mxu0 %v546
  %548 = vmatprep.subr.mxu0 0.0
  %549 = vmatpush1.msra.mxu0 0.0
  %550 = vmatprep.subr.mxu0 0.0
  %551 = vmatpush1.msra.mxu0 0.0
  %552 = vmatprep.subr.mxu0 0.0
  %553 = vmatpush1.msra.mxu0 0.0
  %554 = vmatprep.subr.mxu0 0.0
  %555 = vmatpush1.msra.mxu0 0.0
  %556 = vmatprep.subr.mxu0 0.0
  %557 = vmatpush1.msra.mxu0 0.0
  %558 = vmatprep.subr.mxu0 0.0
  %559 = vmatpush1.msra.mxu0 0.0
  %560 = vmatprep.subr.mxu0 0.0
  %561 = vmatpush1.msra.mxu0 0.0
  %562 = vmatprep.subr.mxu0 0.0
  %563 = vmatpush1.msra.mxu0 0.0
  %564 = vmatprep.subr.mxu0 0.0
  %565 = vmatpush1.msra.mxu0 0.0
  %566 = vmatprep.subr.mxu0 0.0
  %567 = vmatpush1.msra.mxu0 0.0
  %568 = vmatprep.subr.mxu0 0.0
  %569 = vmatpush1.msra.mxu0 0.0
  %570 = vmatprep.subr.mxu0 0.0
  %571 = vmatpush1.msra.mxu0 0.0
  %572 = vmatprep.subr.mxu0 0.0
  %573 = vmatpush1.msra.mxu0 0.0
  %574 = vmatprep.subr.mxu0 0.0
  %575 = vmatpush1.msra.mxu0 0.0
  %576 = vmatprep.subr.mxu0 0.0
  %577 = vmatpush1.msra.mxu0 0.0
  %578 = vmatprep.subr.mxu0 0.0
  %579 = vmatpush1.msra.mxu0 0.0
  %580 = vmatprep.subr.mxu0 0.0
  %581 = vmatpush1.msra.mxu0 0.0
  %582 = vmatprep.subr.mxu0 0.0
  %583 = vmatpush1.msra.mxu0 0.0
  %584 = vmatprep.subr.mxu0 0.0
  %585 = vmatpush1.msra.mxu0 0.0
  %586 = vmatprep.subr.mxu0 0.0
  %587 = vmatpush1.msra.mxu0 0.0
  %588 = vmatprep.subr.mxu0 0.0
  %589 = vmatpush1.msra.mxu0 0.0
  %590 = vmatprep.subr.mxu0 0.0
  %591 = vmatpush1.msra.mxu0 0.0
  %592 = vmatprep.subr.mxu0 0.0
  %593 = vmatpush1.msra.mxu0 0.0
  %594 = vmatprep.subr.mxu0 0.0
  %595 = vmatpush1.msra.mxu0 0.0
  %596 = vmatprep.subr.mxu0 0.0
  %597 = vmatpush1.msra.mxu0 0.0
  %598 = vmatprep.subr.mxu0 0.0
  %599 = vmatpush1.msra.mxu0 0.0
  %600 = vmatprep.subr.mxu0 0.0
  %601 = vmatpush1.msra.mxu0 0.0
  %602 = vmatprep.mubr.f32.mxu0 0.0
  %v603 = vand.u32 %v32, 4294901760
  %604 = vmatmul.mubr.f32.gmra.mrb[0].mxu0 %v603
  %v605 = vpop.f32.mrb[0].mxu0
  %v606 = vadd.f32 %v524, %v605
  %v607 = vpop.f32.mrb[0].mxu0
  %v608 = vadd.f32 %v526, %v607
  %609 = vdwg.mxu0
  %v612 = vrot.slane %v606, 3
  %v613 = vrot.slane %v608, 3
  %vm616 = vcmask 121856
  %v617 = vsel %vm616, %v608, 0.0
  %v618 = vsel %vm616, %v613, 0.0
  %619 = vrot.lane.b32.xlu0 %v606, 127
  %v620 = vpop.permute.xlu0 %619
  %621 = vrot.lane.b32.xlu0 %v608, 127
  %v622 = vpop.permute.xlu0 %621
  %vm623 = vcmask 1039360
  %v624 = vsel %vm623, %v620, %v622
  %626 = vrot.lane.b32.xlu0 %v612, 127
  %v627 = vpop.permute.xlu0 %626
  %628 = vrot.lane.b32.xlu0 %v613, 127
  %v629 = vpop.permute.xlu0 %628
  %v630 = vsel %vm623, %v627, %v629
  %v632 = vsel %vm616, %v622, 0.0
  %v633 = vsel %vm616, %v629, 0.0
  %634 = vrot.lane.b32.xlu0 %v606, 126
  %v635 = vpop.permute.xlu0 %634
  %636 = vrot.lane.b32.xlu0 %v608, 126
  %v637 = vpop.permute.xlu0 %636
  %vm638 = vcmask 1031168
  %v639 = vsel %vm638, %v635, %v637
  %641 = vrot.lane.b32.xlu0 %v612, 126
  %v642 = vpop.permute.xlu0 %641
  %643 = vrot.lane.b32.xlu0 %v613, 126
  %v644 = vpop.permute.xlu0 %643
  %v645 = vsel %vm638, %v642, %v644
  %v647 = vsel %vm616, %v637, 0.0
  %v648 = vsel %vm616, %v644, 0.0
  %649 = vrot.lane.b32.xlu0 %v606, 117
  %v650 = vpop.permute.xlu0 %649
  %651 = vrot.lane.b32.xlu0 %v608, 117
  %v652 = vpop.permute.xlu0 %651
  %vm653 = vcmask 957440
  %v654 = vsel %vm653, %v650, %v652
  %656 = vrot.lane.b32.xlu0 %v612, 117
  %v657 = vpop.permute.xlu0 %656
  %658 = vrot.lane.b32.xlu0 %v613, 117
  %v659 = vpop.permute.xlu0 %658
  %v660 = vsel %vm653, %v657, %v659
  %v662 = vsel %vm616, %v652, 0.0
  %v663 = vsel %vm616, %v659, 0.0
  %664 = vrot.lane.b32.xlu0 %v606, 116
  %v665 = vpop.permute.xlu0 %664
  %666 = vrot.lane.b32.xlu0 %v608, 116
  %v667 = vpop.permute.xlu0 %666
  %vm668 = vcmask 949248
  %v669 = vsel %vm668, %v665, %v667
  %671 = vrot.lane.b32.xlu0 %v612, 116
  %v672 = vpop.permute.xlu0 %671
  %673 = vrot.lane.b32.xlu0 %v613, 116
  %v674 = vpop.permute.xlu0 %673
  %v675 = vsel %vm668, %v672, %v674
  %v677 = vsel %vm616, %v667, 0.0
  %v678 = vsel %vm616, %v674, 0.0
  %679 = vrot.lane.b32.xlu0 %v606, 115
  %v680 = vpop.permute.xlu0 %679
  %681 = vrot.lane.b32.xlu0 %v608, 115
  %v682 = vpop.permute.xlu0 %681
  %vm683 = vcmask 941056
  %v684 = vsel %vm683, %v680, %v682
  %686 = vrot.lane.b32.xlu0 %v612, 115
  %v687 = vpop.permute.xlu0 %686
  %688 = vrot.lane.b32.xlu0 %v613, 115
  %v689 = vpop.permute.xlu0 %688
  %v690 = vsel %vm683, %v687, %v689
  %v692 = vsel %vm616, %v682, 0.0
  %v693 = vsel %vm616, %v689, 0.0
  %694 = vrot.lane.b32.xlu0 %v606, 106
  %v695 = vpop.permute.xlu0 %694
  %696 = vrot.lane.b32.xlu0 %v608, 106
  %v697 = vpop.permute.xlu0 %696
  %vm698 = vcmask 867328
  %v699 = vsel %vm698, %v695, %v697
  %701 = vrot.lane.b32.xlu0 %v612, 106
  %v702 = vpop.permute.xlu0 %701
  %703 = vrot.lane.b32.xlu0 %v613, 106
  %v704 = vpop.permute.xlu0 %703
  %v705 = vsel %vm698, %v702, %v704
  %v707 = vsel %vm616, %v697, 0.0
  %v708 = vsel %vm616, %v704, 0.0
  %709 = vrot.lane.b32.xlu0 %v606, 105
  %v710 = vpop.permute.xlu0 %709
  %711 = vrot.lane.b32.xlu0 %v608, 105
  %v712 = vpop.permute.xlu0 %711
  %vm713 = vcmask 859136
  %v714 = vsel %vm713, %v710, %v712
  %716 = vrot.lane.b32.xlu0 %v612, 105
  %v717 = vpop.permute.xlu0 %716
  %718 = vrot.lane.b32.xlu0 %v613, 105
  %v719 = vpop.permute.xlu0 %718
  %v720 = vsel %vm713, %v717, %v719
  %v722 = vsel %vm616, %v712, 0.0
  %v723 = vsel %vm616, %v719, 0.0
  %724 = vrot.lane.b32.xlu0 %v606, 104
  %v725 = vpop.permute.xlu0 %724
  %726 = vrot.lane.b32.xlu0 %v608, 104
  %v727 = vpop.permute.xlu0 %726
  %vm728 = vcmask 850944
  %v729 = vsel %vm728, %v725, %v727
  %731 = vrot.lane.b32.xlu0 %v612, 104
  %v732 = vpop.permute.xlu0 %731
  %733 = vrot.lane.b32.xlu0 %v613, 104
  %v734 = vpop.permute.xlu0 %733
  %v735 = vsel %vm728, %v732, %v734
  %v737 = vsel %vm616, %v727, 0.0
  %v738 = vsel %vm616, %v734, 0.0
  %v741 = vrot.slane %v624, 5
  %v742 = vrot.slane %v632, 5
  %v743 = vrot.slane %v630, 5
  %v744 = vrot.slane %v633, 5
  %v751 = vrot.slane %v639, 2
  %v752 = vrot.slane %v647, 2
  %v753 = vrot.slane %v645, 2
  %v754 = vrot.slane %v648, 2
  %v761 = vrot.slane %v654, 7
  %v762 = vrot.slane %v662, 7
  %v763 = vrot.slane %v660, 7
  %v764 = vrot.slane %v663, 7
  %v771 = vrot.slane %v669, 4
  %v772 = vrot.slane %v677, 4
  %v773 = vrot.slane %v675, 4
  %v774 = vrot.slane %v678, 4
  %v781 = vrot.slane %v684, 1
  %v782 = vrot.slane %v692, 1
  %v783 = vrot.slane %v690, 1
  %v784 = vrot.slane %v693, 1
  %v791 = vrot.slane %v699, 6
  %v792 = vrot.slane %v707, 6
  %v793 = vrot.slane %v705, 6
  %v794 = vrot.slane %v708, 6
  %v801 = vrot.slane %v714, 3
  %v802 = vrot.slane %v722, 3
  %v803 = vrot.slane %v720, 3
  %v804 = vrot.slane %v723, 3
  %vm809 = vcmask 1042432
  %v810 = vsel %vm809, %v606, %v741
  %v811 = vsel %vm809, %v617, %v742
  %v812 = vsel %vm809, %v612, %v743
  %v813 = vsel %vm809, %v618, %v744
  %vm814 = vcmask 1045504
  %v815 = vsel %vm814, %v810, %v751
  %v816 = vsel %vm814, %v811, %v752
  %v817 = vsel %vm814, %v812, %v753
  %v818 = vsel %vm814, %v813, %v754
  %vm819 = vcmask 1040384
  %v820 = vsel %vm819, %v751, %v761
  %v821 = vsel %vm819, %v752, %v762
  %v822 = vsel %vm819, %v753, %v763
  %v823 = vsel %vm819, %v754, %v764
  %v824 = vsel %vm34, %v820, %v771
  %v825 = vsel %vm34, %v821, %v772
  %v826 = vsel %vm34, %v822, %v773
  %v827 = vsel %vm34, %v823, %v774
  %vm828 = vcmask 1046528
  %v829 = vsel %vm828, %v824, %v781
  %v830 = vsel %vm828, %v825, %v782
  %v831 = vsel %vm828, %v826, %v783
  %v832 = vsel %vm828, %v827, %v784
  %vm833 = vcmask 1041408
  %v834 = vsel %vm833, %v781, %v791
  %v835 = vsel %vm833, %v782, %v792
  %v836 = vsel %vm833, %v783, %v793
  %v837 = vsel %vm833, %v784, %v794
  %vm838 = vcmask 1044480
  %v839 = vsel %vm838, %v834, %v801
  %v840 = vsel %vm838, %v835, %v802
  %v841 = vsel %vm838, %v836, %v803
  %v842 = vsel %vm838, %v837, %v804
  %844 = vset.pattern.permute.xlu0 0
  %845 = vperm.xlu0 %844, %v29
  %v846 = vpop.permute.xlu0 %845
  %vm848 = vcmask 220160
  %v850 = vsel %vm848, %v28, 0
  %v852 = vsel %vm809, %v729, 0
  %v855 = vsel %vm809, %v737, 0
  %v857 = vsel %vm809, %v735, 0
  %v860 = vsel %vm809, %v738, 0
  %v862 = vand.u32 %v816, 4294901760
  %863 = vmatprep.subr.mxu0 %v862
  %v864 = vand.u32 %v815, 4294901760
  %865 = vmatpush1.msra.mxu0 %v864
  %v866 = vand.u32 %v830, 4294901760
  %867 = vmatprep.subr.mxu0 %v866
  %v868 = vand.u32 %v829, 4294901760
  %869 = vmatpush1.msra.mxu0 %v868
  %v870 = vand.u32 %v840, 4294901760
  %871 = vmatprep.subr.mxu0 %v870
  %v872 = vand.u32 %v839, 4294901760
  %873 = vmatpush1.msra.mxu0 %v872
  %v874 = vand.u32 %v855, 4294901760
  %875 = vmatprep.subr.mxu0 %v874
  %v876 = vand.u32 %v852, 4294901760
  %877 = vmatpush1.msra.mxu0 %v876
  %878 = vmatprep.subr.mxu0 0.0
  %879 = vmatpush1.msra.mxu0 0.0
  %880 = vmatprep.subr.mxu0 0.0
  %881 = vmatpush1.msra.mxu0 0.0
  %882 = vmatprep.subr.mxu0 0.0
  %883 = vmatpush1.msra.mxu0 0.0
  %884 = vmatprep.subr.mxu0 0.0
  %885 = vmatpush1.msra.mxu0 0.0
  %886 = vmatprep.subr.mxu0 0.0
  %887 = vmatpush1.msra.mxu0 0.0
  %888 = vmatprep.subr.mxu0 0.0
  %889 = vmatpush1.msra.mxu0 0.0
  %890 = vmatprep.subr.mxu0 0.0
  %891 = vmatpush1.msra.mxu0 0.0
  %892 = vmatprep.subr.mxu0 0.0
  %893 = vmatpush1.msra.mxu0 0.0
  %894 = vmatprep.subr.mxu0 0.0
  %895 = vmatpush1.msra.mxu0 0.0
  %896 = vmatprep.subr.mxu0 0.0
  %897 = vmatpush1.msra.mxu0 0.0
  %898 = vmatprep.subr.mxu0 0.0
  %899 = vmatpush1.msra.mxu0 0.0
  %900 = vmatprep.subr.mxu0 0.0
  %901 = vmatpush1.msra.mxu0 0.0
  %902 = vmatprep.subr.mxu0 0.0
  %903 = vmatpush1.msra.mxu0 0.0
  %904 = vmatprep.subr.mxu0 0.0
  %905 = vmatpush1.msra.mxu0 0.0
  %906 = vmatprep.subr.mxu0 0.0
  %907 = vmatpush1.msra.mxu0 0.0
  %908 = vmatprep.subr.mxu0 0.0
  %909 = vmatpush1.msra.mxu0 0.0
  %910 = vmatprep.subr.mxu0 0.0
  %911 = vmatpush1.msra.mxu0 0.0
  %912 = vmatprep.subr.mxu0 0.0
  %913 = vmatpush1.msra.mxu0 0.0
  %914 = vmatprep.subr.mxu0 0.0
  %915 = vmatpush1.msra.mxu0 0.0
  %916 = vmatprep.subr.mxu0 0.0
  %917 = vmatpush1.msra.mxu0 0.0
  %918 = vmatprep.subr.mxu0 0.0
  %919 = vmatpush1.msra.mxu0 0.0
  %920 = vmatprep.subr.mxu0 0.0
  %921 = vmatpush1.msra.mxu0 0.0
  %922 = vmatprep.subr.mxu0 0.0
  %923 = vmatpush1.msra.mxu0 0.0
  %924 = vmatprep.subr.mxu0 0.0
  %925 = vmatpush1.msra.mxu0 0.0
  %926 = vmatprep.subr.mxu0 0.0
  %927 = vmatpush1.msra.mxu0 0.0
  %928 = vmatprep.subr.mxu0 0.0
  %929 = vmatpush1.msra.mxu0 0.0
  %930 = vmatprep.subr.mxu0 0.0
  %931 = vmatpush1.msra.mxu0 0.0
  %932 = vmatprep.subr.mxu0 0.0
  %933 = vmatpush1.msra.mxu0 0.0
  %934 = vmatprep.mubr.f32.mxu0 0.0
  %v935 = vand.u32 %v850, 4294901760
  %v936 = vsub.f32 %v850, %v935
  %v937 = vand.u32 %v936, 4294901760
  %v938 = vsub.f32 %v936, %v937
  %v939 = vand.u32 %v938, 4294901760
  %940 = vmatmul.mubr.f32.gmra.mrb[0].mxu0 %v939
  %v941 = vpop.f32.mrb[0].mxu0
  %v942 = vadd.f32 %v846, %v941
  %v943 = vpop.f32.mrb[0].mxu0
  %v944 = vadd.f32 %v846, %v943
  %945 = vdwg.mxu0
  %v946 = vand.u32 %v816, 4294901760
  %v947 = vsub.f32 %v816, %v946
  %v948 = vand.u32 %v947, 4294901760
  %v949 = vsub.f32 %v947, %v948
  %v950 = vand.u32 %v949, 4294901760
  %951 = vmatprep.subr.mxu0 %v950
  %v952 = vand.u32 %v815, 4294901760
  %v953 = vsub.f32 %v815, %v952
  %v954 = vand.u32 %v953, 4294901760
  %v955 = vsub.f32 %v953, %v954
  %v956 = vand.u32 %v955, 4294901760
  %957 = vmatpush1.msra.mxu0 %v956
  %v958 = vand.u32 %v830, 4294901760
  %v959 = vsub.f32 %v830, %v958
  %v960 = vand.u32 %v959, 4294901760
  %v961 = vsub.f32 %v959, %v960
  %v962 = vand.u32 %v961, 4294901760
  %963 = vmatprep.subr.mxu0 %v962
  %v964 = vand.u32 %v829, 4294901760
  %v965 = vsub.f32 %v829, %v964
  %v966 = vand.u32 %v965, 4294901760
  %v967 = vsub.f32 %v965, %v966
  %v968 = vand.u32 %v967, 4294901760
  %969 = vmatpush1.msra.mxu0 %v968
  %v970 = vand.u32 %v840, 4294901760
  %v971 = vsub.f32 %v840, %v970
  %v972 = vand.u32 %v971, 4294901760
  %v973 = vsub.f32 %v971, %v972
  %v974 = vand.u32 %v973, 4294901760
  %975 = vmatprep.subr.mxu0 %v974
  %v976 = vand.u32 %v839, 4294901760
  %v977 = vsub.f32 %v839, %v976
  %v978 = vand.u32 %v977, 4294901760
  %v979 = vsub.f32 %v977, %v978
  %v980 = vand.u32 %v979, 4294901760
  %981 = vmatpush1.msra.mxu0 %v980
  %v982 = vand.u32 %v855, 4294901760
  %v983 = vsub.f32 %v855, %v982
  %v984 = vand.u32 %v983, 4294901760
  %v985 = vsub.f32 %v983, %v984
  %v986 = vand.u32 %v985, 4294901760
  %987 = vmatprep.subr.mxu0 %v986
  %v988 = vand.u32 %v852, 4294901760
  %v989 = vsub.f32 %v852, %v988
  %v990 = vand.u32 %v989, 4294901760
  %v991 = vsub.f32 %v989, %v990
  %v992 = vand.u32 %v991, 4294901760
  %993 = vmatpush1.msra.mxu0 %v992
  %994 = vmatprep.subr.mxu0 0.0
  %995 = vmatpush1.msra.mxu0 0.0
  %996 = vmatprep.subr.mxu0 0.0
  %997 = vmatpush1.msra.mxu0 0.0
  %998 = vmatprep.subr.mxu0 0.0
  %999 = vmatpush1.msra.mxu0 0.0
  %1000 = vmatprep.subr.mxu0 0.0
  %1001 = vmatpush1.msra.mxu0 0.0
  %1002 = vmatprep.subr.mxu0 0.0
  %1003 = vmatpush1.msra.mxu0 0.0
  %1004 = vmatprep.subr.mxu0 0.0
  %1005 = vmatpush1.msra.mxu0 0.0
  %1006 = vmatprep.subr.mxu0 0.0
  %1007 = vmatpush1.msra.mxu0 0.0
  %1008 = vmatprep.subr.mxu0 0.0
  %1009 = vmatpush1.msra.mxu0 0.0
  %1010 = vmatprep.subr.mxu0 0.0
  %1011 = vmatpush1.msra.mxu0 0.0
  %1012 = vmatprep.subr.mxu0 0.0
  %1013 = vmatpush1.msra.mxu0 0.0
  %1014 = vmatprep.subr.mxu0 0.0
  %1015 = vmatpush1.msra.mxu0 0.0
  %1016 = vmatprep.subr.mxu0 0.0
  %1017 = vmatpush1.msra.mxu0 0.0
  %1018 = vmatprep.subr.mxu0 0.0
  %1019 = vmatpush1.msra.mxu0 0.0
  %1020 = vmatprep.subr.mxu0 0.0
  %1021 = vmatpush1.msra.mxu0 0.0
  %1022 = vmatprep.subr.mxu0 0.0
  %1023 = vmatpush1.msra.mxu0 0.0
  %1024 = vmatprep.subr.mxu0 0.0
  %1025 = vmatpush1.msra.mxu0 0.0
  %1026 = vmatprep.subr.mxu0 0.0
  %1027 = vmatpush1.msra.mxu0 0.0
  %1028 = vmatprep.subr.mxu0 0.0
  %1029 = vmatpush1.msra.mxu0 0.0
  %1030 = vmatprep.subr.mxu0 0.0
  %1031 = vmatpush1.msra.mxu0 0.0
  %1032 = vmatprep.subr.mxu0 0.0
  %1033 = vmatpush1.msra.mxu0 0.0
  %1034 = vmatprep.subr.mxu0 0.0
  %1035 = vmatpush1.msra.mxu0 0.0
  %1036 = vmatprep.subr.mxu0 0.0
  %1037 = vmatpush1.msra.mxu0 0.0
  %1038 = vmatprep.subr.mxu0 0.0
  %1039 = vmatpush1.msra.mxu0 0.0
  %1040 = vmatprep.subr.mxu0 0.0
  %1041 = vmatpush1.msra.mxu0 0.0
  %1042 = vmatprep.subr.mxu0 0.0
  %1043 = vmatpush1.msra.mxu0 0.0
  %1044 = vmatprep.subr.mxu0 0.0
  %1045 = vmatpush1.msra.mxu0 0.0
  %1046 = vmatprep.subr.mxu0 0.0
  %1047 = vmatpush1.msra.mxu0 0.0
  %1048 = vmatprep.subr.mxu0 0.0
  %1049 = vmatpush1.msra.mxu0 0.0
  %1050 = vmatprep.mubr.f32.mxu0 0.0
  %v1051 = vand.u32 %v850, 4294901760
  %1052 = vmatmul.mubr.f32.gmra.mrb[0].mxu0 %v1051
  %v1053 = vpop.f32.mrb[0].mxu0
  %v1054 = vadd.f32 %v942, %v1053
  %v1055 = vpop.f32.mrb[0].mxu0
  %v1056 = vadd.f32 %v944, %v1055
  %1057 = vdwg.mxu0
  %v1058 = vand.u32 %v816, 4294901760
  %v1059 = vsub.f32 %v816, %v1058
  %1060 = vmatprep.subr.mxu0 %v1059
  %v1061 = vand.u32 %v815, 4294901760
  %v1062 = vsub.f32 %v815, %v1061
  %1063 = vmatpush1.msra.mxu0 %v1062
  %v1064 = vand.u32 %v830, 4294901760
  %v1065 = vsub.f32 %v830, %v1064
  %1066 = vmatprep.subr.mxu0 %v1065
  %v1067 = vand.u32 %v829, 4294901760
  %v1068 = vsub.f32 %v829, %v1067
  %1069 = vmatpush1.msra.mxu0 %v1068
  %v1070 = vand.u32 %v840, 4294901760
  %v1071 = vsub.f32 %v840, %v1070
  %1072 = vmatprep.subr.mxu0 %v1071
  %v1073 = vand.u32 %v839, 4294901760
  %v1074 = vsub.f32 %v839, %v1073
  %1075 = vmatpush1.msra.mxu0 %v1074
  %v1076 = vand.u32 %v855, 4294901760
  %v1077 = vsub.f32 %v855, %v1076
  %1078 = vmatprep.subr.mxu0 %v1077
  %v1079 = vand.u32 %v852, 4294901760
  %v1080 = vsub.f32 %v852, %v1079
  %1081 = vmatpush1.msra.mxu0 %v1080
  %1082 = vmatprep.subr.mxu0 0.0
  %1083 = vmatpush1.msra.mxu0 0.0
  %1084 = vmatprep.subr.mxu0 0.0
  %1085 = vmatpush1.msra.mxu0 0.0
  %1086 = vmatprep.subr.mxu0 0.0
  %1087 = vmatpush1.msra.mxu0 0.0
  %1088 = vmatprep.subr.mxu0 0.0
  %1089 = vmatpush1.msra.mxu0 0.0
  %1090 = vmatprep.subr.mxu0 0.0
  %1091 = vmatpush1.msra.mxu0 0.0
  %1092 = vmatprep.subr.mxu0 0.0
  %1093 = vmatpush1.msra.mxu0 0.0
  %1094 = vmatprep.subr.mxu0 0.0
  %1095 = vmatpush1.msra.mxu0 0.0
  %1096 = vmatprep.subr.mxu0 0.0
  %1097 = vmatpush1.msra.mxu0 0.0
  %1098 = vmatprep.subr.mxu0 0.0
  %1099 = vmatpush1.msra.mxu0 0.0
  %1100 = vmatprep.subr.mxu0 0.0
  %1101 = vmatpush1.msra.mxu0 0.0
  %1102 = vmatprep.subr.mxu0 0.0
  %1103 = vmatpush1.msra.mxu0 0.0
  %1104 = vmatprep.subr.mxu0 0.0
  %1105 = vmatpush1.msra.mxu0 0.0
  %1106 = vmatprep.subr.mxu0 0.0
  %1107 = vmatpush1.msra.mxu0 0.0
  %1108 = vmatprep.subr.mxu0 0.0
  %1109 = vmatpush1.msra.mxu0 0.0
  %1110 = vmatprep.subr.mxu0 0.0
  %1111 = vmatpush1.msra.mxu0 0.0
  %1112 = vmatprep.subr.mxu0 0.0
  %1113 = vmatpush1.msra.mxu0 0.0
  %1114 = vmatprep.subr.mxu0 0.0
  %1115 = vmatpush1.msra.mxu0 0.0
  %1116 = vmatprep.subr.mxu0 0.0
  %1117 = vmatpush1.msra.mxu0 0.0
  %1118 = vmatprep.subr.mxu0 0.0
  %1119 = vmatpush1.msra.mxu0 0.0
  %1120 = vmatprep.subr.mxu0 0.0
  %1121 = vmatpush1.msra.mxu0 0.0
  %1122 = vmatprep.subr.mxu0 0.0
  %1123 = vmatpush1.msra.mxu0 0.0
  %1124 = vmatprep.subr.mxu0 0.0
  %1125 = vmatpush1.msra.mxu0 0.0
  %1126 = vmatprep.subr.mxu0 0.0
  %1127 = vmatpush1.msra.mxu0 0.0
  %1128 = vmatprep.subr.mxu0 0.0
  %1129 = vmatpush1.msra.mxu0 0.0
  %1130 = vmatprep.subr.mxu0 0.0
  %1131 = vmatpush1.msra.mxu0 0.0
  %1132 = vmatprep.subr.mxu0 0.0
  %1133 = vmatpush1.msra.mxu0 0.0
  %1134 = vmatprep.subr.mxu0 0.0
  %1135 = vmatpush1.msra.mxu0 0.0
  %1136 = vmatprep.subr.mxu0 0.0
  %1137 = vmatpush1.msra.mxu0 0.0
  %1138 = vmatprep.mubr.f32.mxu0 0.0
  %v1139 = vand.u32 %v850, 4294901760
  %v1140 = vsub.f32 %v850, %v1139
  %1141 = vmatmul.mubr.f32.gmra.mrb[0].mxu0 %v1140
  %v1142 = vpop.f32.mrb[0].mxu0
  %v1143 = vadd.f32 %v1054, %v1142
  %v1144 = vpop.f32.mrb[0].mxu0
  %v1145 = vadd.f32 %v1056, %v1144
  %1146 = vdwg.mxu0
  %v1147 = vand.u32 %v816, 4294901760
  %1148 = vmatprep.subr.mxu0 %v1147
  %v1149 = vand.u32 %v815, 4294901760
  %1150 = vmatpush1.msra.mxu0 %v1149
  %v1151 = vand.u32 %v830, 4294901760
  %1152 = vmatprep.subr.mxu0 %v1151
  %v1153 = vand.u32 %v829, 4294901760
  %1154 = vmatpush1.msra.mxu0 %v1153
  %v1155 = vand.u32 %v840, 4294901760
  %1156 = vmatprep.subr.mxu0 %v1155
  %v1157 = vand.u32 %v839, 4294901760
  %1158 = vmatpush1.msra.mxu0 %v1157
  %v1159 = vand.u32 %v855, 4294901760
  %1160 = vmatprep.subr.mxu0 %v1159
  %v1161 = vand.u32 %v852, 4294901760
  %1162 = vmatpush1.msra.mxu0 %v1161
  %1163 = vmatprep.subr.mxu0 0.0
  %1164 = vmatpush1.msra.mxu0 0.0
  %1165 = vmatprep.subr.mxu0 0.0
  %1166 = vmatpush1.msra.mxu0 0.0
  %1167 = vmatprep.subr.mxu0 0.0
  %1168 = vmatpush1.msra.mxu0 0.0
  %1169 = vmatprep.subr.mxu0 0.0
  %1170 = vmatpush1.msra.mxu0 0.0
  %1171 = vmatprep.subr.mxu0 0.0
  %1172 = vmatpush1.msra.mxu0 0.0
  %1173 = vmatprep.subr.mxu0 0.0
  %1174 = vmatpush1.msra.mxu0 0.0
  %1175 = vmatprep.subr.mxu0 0.0
  %1176 = vmatpush1.msra.mxu0 0.0
  %1177 = vmatprep.subr.mxu0 0.0
  %1178 = vmatpush1.msra.mxu0 0.0
  %1179 = vmatprep.subr.mxu0 0.0
  %1180 = vmatpush1.msra.mxu0 0.0
  %1181 = vmatprep.subr.mxu0 0.0
  %1182 = vmatpush1.msra.mxu0 0.0
  %1183 = vmatprep.subr.mxu0 0.0
  %1184 = vmatpush1.msra.mxu0 0.0
  %1185 = vmatprep.subr.mxu0 0.0
  %1186 = vmatpush1.msra.mxu0 0.0
  %1187 = vmatprep.subr.mxu0 0.0
  %1188 = vmatpush1.msra.mxu0 0.0
  %1189 = vmatprep.subr.mxu0 0.0
  %1190 = vmatpush1.msra.mxu0 0.0
  %1191 = vmatprep.subr.mxu0 0.0
  %1192 = vmatpush1.msra.mxu0 0.0
  %1193 = vmatprep.subr.mxu0 0.0
  %1194 = vmatpush1.msra.mxu0 0.0
  %1195 = vmatprep.subr.mxu0 0.0
  %1196 = vmatpush1.msra.mxu0 0.0
  %1197 = vmatprep.subr.mxu0 0.0
  %1198 = vmatpush1.msra.mxu0 0.0
  %1199 = vmatprep.subr.mxu0 0.0
  %1200 = vmatpush1.msra.mxu0 0.0
  %1201 = vmatprep.subr.mxu0 0.0
  %1202 = vmatpush1.msra.mxu0 0.0
  %1203 = vmatprep.subr.mxu0 0.0
  %1204 = vmatpush1.msra.mxu0 0.0
  %1205 = vmatprep.subr.mxu0 0.0
  %1206 = vmatpush1.msra.mxu0 0.0
  %1207 = vmatprep.subr.mxu0 0.0
  %1208 = vmatpush1.msra.mxu0 0.0
  %1209 = vmatprep.subr.mxu0 0.0
  %1210 = vmatpush1.msra.mxu0 0.0
  %1211 = vmatprep.subr.mxu0 0.0
  %1212 = vmatpush1.msra.mxu0 0.0
  %1213 = vmatprep.subr.mxu0 0.0
  %1214 = vmatpush1.msra.mxu0 0.0
  %1215 = vmatprep.subr.mxu0 0.0
  %1216 = vmatpush1.msra.mxu0 0.0
  %1217 = vmatprep.subr.mxu0 0.0
  %1218 = vmatpush1.msra.mxu0 0.0
  %1219 = vmatprep.mubr.f32.mxu0 0.0
  %v1220 = vand.u32 %v850, 4294901760
  %v1221 = vsub.f32 %v850, %v1220
  %v1222 = vand.u32 %v1221, 4294901760
  %1223 = vmatmul.mubr.f32.gmra.mrb[0].mxu0 %v1222
  %v1224 = vpop.f32.mrb[0].mxu0
  %v1225 = vadd.f32 %v1143, %v1224
  %v1226 = vpop.f32.mrb[0].mxu0
  %v1227 = vadd.f32 %v1145, %v1226
  %1228 = vdwg.mxu0
  %v1229 = vand.u32 %v816, 4294901760
  %v1230 = vsub.f32 %v816, %v1229
  %v1231 = vand.u32 %v1230, 4294901760
  %1232 = vmatprep.subr.mxu0 %v1231
  %v1233 = vand.u32 %v815, 4294901760
  %v1234 = vsub.f32 %v815, %v1233
  %v1235 = vand.u32 %v1234, 4294901760
  %1236 = vmatpush1.msra.mxu0 %v1235
  %v1237 = vand.u32 %v830, 4294901760
  %v1238 = vsub.f32 %v830, %v1237
  %v1239 = vand.u32 %v1238, 4294901760
  %1240 = vmatprep.subr.mxu0 %v1239
  %v1241 = vand.u32 %v829, 4294901760
  %v1242 = vsub.f32 %v829, %v1241
  %v1243 = vand.u32 %v1242, 4294901760
  %1244 = vmatpush1.msra.mxu0 %v1243
  %v1245 = vand.u32 %v840, 4294901760
  %v1246 = vsub.f32 %v840, %v1245
  %v1247 = vand.u32 %v1246, 4294901760
  %1248 = vmatprep.subr.mxu0 %v1247
  %v1249 = vand.u32 %v839, 4294901760
  %v1250 = vsub.f32 %v839, %v1249
  %v1251 = vand.u32 %v1250, 4294901760
  %1252 = vmatpush1.msra.mxu0 %v1251
  %v1253 = vand.u32 %v855, 4294901760
  %v1254 = vsub.f32 %v855, %v1253
  %v1255 = vand.u32 %v1254, 4294901760
  %1256 = vmatprep.subr.mxu0 %v1255
  %v1257 = vand.u32 %v852, 4294901760
  %v1258 = vsub.f32 %v852, %v1257
  %v1259 = vand.u32 %v1258, 4294901760
  %1260 = vmatpush1.msra.mxu0 %v1259
  %1261 = vmatprep.subr.mxu0 0.0
  %1262 = vmatpush1.msra.mxu0 0.0
  %1263 = vmatprep.subr.mxu0 0.0
  %1264 = vmatpush1.msra.mxu0 0.0
  %1265 = vmatprep.subr.mxu0 0.0
  %1266 = vmatpush1.msra.mxu0 0.0
  %1267 = vmatprep.subr.mxu0 0.0
  %1268 = vmatpush1.msra.mxu0 0.0
  %1269 = vmatprep.subr.mxu0 0.0
  %1270 = vmatpush1.msra.mxu0 0.0
  %1271 = vmatprep.subr.mxu0 0.0
  %1272 = vmatpush1.msra.mxu0 0.0
  %1273 = vmatprep.subr.mxu0 0.0
  %1274 = vmatpush1.msra.mxu0 0.0
  %1275 = vmatprep.subr.mxu0 0.0
  %1276 = vmatpush1.msra.mxu0 0.0
  %1277 = vmatprep.subr.mxu0 0.0
  %1278 = vmatpush1.msra.mxu0 0.0
  %1279 = vmatprep.subr.mxu0 0.0
  %1280 = vmatpush1.msra.mxu0 0.0
  %1281 = vmatprep.subr.mxu0 0.0
  %1282 = vmatpush1.msra.mxu0 0.0
  %1283 = vmatprep.subr.mxu0 0.0
  %1284 = vmatpush1.msra.mxu0 0.0
  %1285 = vmatprep.subr.mxu0 0.0
  %1286 = vmatpush1.msra.mxu0 0.0
  %1287 = vmatprep.subr.mxu0 0.0
  %1288 = vmatpush1.msra.mxu0 0.0
  %1289 = vmatprep.subr.mxu0 0.0
  %1290 = vmatpush1.msra.mxu0 0.0
  %1291 = vmatprep.subr.mxu0 0.0
  %1292 = vmatpush1.msra.mxu0 0.0
  %1293 = vmatprep.subr.mxu0 0.0
  %1294 = vmatpush1.msra.mxu0 0.0
  %1295 = vmatprep.subr.mxu0 0.0
  %1296 = vmatpush1.msra.mxu0 0.0
  %1297 = vmatprep.subr.mxu0 0.0
  %1298 = vmatpush1.msra.mxu0 0.0
  %1299 = vmatprep.subr.mxu0 0.0
  %1300 = vmatpush1.msra.mxu0 0.0
  %1301 = vmatprep.subr.mxu0 0.0
  %1302 = vmatpush1.msra.mxu0 0.0
  %1303 = vmatprep.subr.mxu0 0.0
  %1304 = vmatpush1.msra.mxu0 0.0
  %1305 = vmatprep.subr.mxu0 0.0
  %1306 = vmatpush1.msra.mxu0 0.0
  %1307 = vmatprep.subr.mxu0 0.0
  %1308 = vmatpush1.msra.mxu0 0.0
  %1309 = vmatprep.subr.mxu0 0.0
  %1310 = vmatpush1.msra.mxu0 0.0
  %1311 = vmatprep.subr.mxu0 0.0
  %1312 = vmatpush1.msra.mxu0 0.0
  %1313 = vmatprep.subr.mxu0 0.0
  %1314 = vmatpush1.msra.mxu0 0.0
  %1315 = vmatprep.subr.mxu0 0.0
  %1316 = vmatpush1.msra.mxu0 0.0
  %1317 = vmatprep.mubr.f32.mxu0 0.0
  %v1318 = vand.u32 %v850, 4294901760
  %1319 = vmatmul.mubr.f32.gmra.mrb[0].mxu0 %v1318
  %v1320 = vpop.f32.mrb[0].mxu0
  %v1321 = vadd.f32 %v1225, %v1320
  %v1322 = vpop.f32.mrb[0].mxu0
  %v1323 = vadd.f32 %v1227, %v1322
  %1324 = vdwg.mxu0
  %v1325 = vand.u32 %v816, 4294901760
  %1326 = vmatprep.subr.mxu0 %v1325
  %v1327 = vand.u32 %v815, 4294901760
  %1328 = vmatpush1.msra.mxu0 %v1327
  %v1329 = vand.u32 %v830, 4294901760
  %1330 = vmatprep.subr.mxu0 %v1329
  %v1331 = vand.u32 %v829, 4294901760
  %1332 = vmatpush1.msra.mxu0 %v1331
  %v1333 = vand.u32 %v840, 4294901760
  %1334 = vmatprep.subr.mxu0 %v1333
  %v1335 = vand.u32 %v839, 4294901760
  %1336 = vmatpush1.msra.mxu0 %v1335
  %v1337 = vand.u32 %v855, 4294901760
  %1338 = vmatprep.subr.mxu0 %v1337
  %v1339 = vand.u32 %v852, 4294901760
  %1340 = vmatpush1.msra.mxu0 %v1339
  %1341 = vmatprep.subr.mxu0 0.0
  %1342 = vmatpush1.msra.mxu0 0.0
  %1343 = vmatprep.subr.mxu0 0.0
  %1344 = vmatpush1.msra.mxu0 0.0
  %1345 = vmatprep.subr.mxu0 0.0
  %1346 = vmatpush1.msra.mxu0 0.0
  %1347 = vmatprep.subr.mxu0 0.0
  %1348 = vmatpush1.msra.mxu0 0.0
  %1349 = vmatprep.subr.mxu0 0.0
  %1350 = vmatpush1.msra.mxu0 0.0
  %1351 = vmatprep.subr.mxu0 0.0
  %1352 = vmatpush1.msra.mxu0 0.0
  %1353 = vmatprep.subr.mxu0 0.0
  %1354 = vmatpush1.msra.mxu0 0.0
  %1355 = vmatprep.subr.mxu0 0.0
  %1356 = vmatpush1.msra.mxu0 0.0
  %1357 = vmatprep.subr.mxu0 0.0
  %1358 = vmatpush1.msra.mxu0 0.0
  %1359 = vmatprep.subr.mxu0 0.0
  %1360 = vmatpush1.msra.mxu0 0.0
  %1361 = vmatprep.subr.mxu0 0.0
  %1362 = vmatpush1.msra.mxu0 0.0
  %1363 = vmatprep.subr.mxu0 0.0
  %1364 = vmatpush1.msra.mxu0 0.0
  %1365 = vmatprep.subr.mxu0 0.0
  %1366 = vmatpush1.msra.mxu0 0.0
  %1367 = vmatprep.subr.mxu0 0.0
  %1368 = vmatpush1.msra.mxu0 0.0
  %1369 = vmatprep.subr.mxu0 0.0
  %1370 = vmatpush1.msra.mxu0 0.0
  %1371 = vmatprep.subr.mxu0 0.0
  %1372 = vmatpush1.msra.mxu0 0.0
  %1373 = vmatprep.subr.mxu0 0.0
  %1374 = vmatpush1.msra.mxu0 0.0
  %1375 = vmatprep.subr.mxu0 0.0
  %1376 = vmatpush1.msra.mxu0 0.0
  %1377 = vmatprep.subr.mxu0 0.0
  %1378 = vmatpush1.msra.mxu0 0.0
  %1379 = vmatprep.subr.mxu0 0.0
  %1380 = vmatpush1.msra.mxu0 0.0
  %1381 = vmatprep.subr.mxu0 0.0
  %1382 = vmatpush1.msra.mxu0 0.0
  %1383 = vmatprep.subr.mxu0 0.0
  %1384 = vmatpush1.msra.mxu0 0.0
  %1385 = vmatprep.subr.mxu0 0.0
  %1386 = vmatpush1.msra.mxu0 0.0
  %1387 = vmatprep.subr.mxu0 0.0
  %1388 = vmatpush1.msra.mxu0 0.0
  %1389 = vmatprep.subr.mxu0 0.0
  %1390 = vmatpush1.msra.mxu0 0.0
  %1391 = vmatprep.subr.mxu0 0.0
  %1392 = vmatpush1.msra.mxu0 0.0
  %1393 = vmatprep.subr.mxu0 0.0
  %1394 = vmatpush1.msra.mxu0 0.0
  %1395 = vmatprep.subr.mxu0 0.0
  %1396 = vmatpush1.msra.mxu0 0.0
  %1397 = vmatprep.mubr.f32.mxu0 0.0
  %v1398 = vand.u32 %v850, 4294901760
  %1399 = vmatmul.mubr.f32.gmra.mrb[0].mxu0 %v1398
  %v1400 = vpop.f32.mrb[0].mxu0
  %v1401 = vadd.f32 %v1321, %v1400
  %v1402 = vpop.f32.mrb[0].mxu0
  %v1403 = vadd.f32 %v1323, %v1402
  %1404 = vdwg.mxu0
  %v1405 = vand.u32 %v818, 4294901760
  %1406 = vmatprep.subr.mxu0 %v1405
  %v1407 = vand.u32 %v817, 4294901760
  %1408 = vmatpush1.msra.mxu0 %v1407
  %v1409 = vand.u32 %v832, 4294901760
  %1410 = vmatprep.subr.mxu0 %v1409
  %v1411 = vand.u32 %v831, 4294901760
  %1412 = vmatpush1.msra.mxu0 %v1411
  %v1413 = vand.u32 %v842, 4294901760
  %1414 = vmatprep.subr.mxu0 %v1413
  %v1415 = vand.u32 %v841, 4294901760
  %1416 = vmatpush1.msra.mxu0 %v1415
  %v1417 = vand.u32 %v860, 4294901760
  %1418 = vmatprep.subr.mxu0 %v1417
  %v1419 = vand.u32 %v857, 4294901760
  %1420 = vmatpush1.msra.mxu0 %v1419
  %1421 = vmatprep.subr.mxu0 0.0
  %1422 = vmatpush1.msra.mxu0 0.0
  %1423 = vmatprep.subr.mxu0 0.0
  %1424 = vmatpush1.msra.mxu0 0.0
  %1425 = vmatprep.subr.mxu0 0.0
  %1426 = vmatpush1.msra.mxu0 0.0
  %1427 = vmatprep.subr.mxu0 0.0
  %1428 = vmatpush1.msra.mxu0 0.0
  %1429 = vmatprep.subr.mxu0 0.0
  %1430 = vmatpush1.msra.mxu0 0.0
  %1431 = vmatprep.subr.mxu0 0.0
  %1432 = vmatpush1.msra.mxu0 0.0
  %1433 = vmatprep.subr.mxu0 0.0
  %1434 = vmatpush1.msra.mxu0 0.0
  %1435 = vmatprep.subr.mxu0 0.0
  %1436 = vmatpush1.msra.mxu0 0.0
  %1437 = vmatprep.subr.mxu0 0.0
  %1438 = vmatpush1.msra.mxu0 0.0
  %1439 = vmatprep.subr.mxu0 0.0
  %1440 = vmatpush1.msra.mxu0 0.0
  %1441 = vmatprep.subr.mxu0 0.0
  %1442 = vmatpush1.msra.mxu0 0.0
  %1443 = vmatprep.subr.mxu0 0.0
  %1444 = vmatpush1.msra.mxu0 0.0
  %1445 = vmatprep.subr.mxu0 0.0
  %1446 = vmatpush1.msra.mxu0 0.0
  %1447 = vmatprep.subr.mxu0 0.0
  %1448 = vmatpush1.msra.mxu0 0.0
  %1449 = vmatprep.subr.mxu0 0.0
  %1450 = vmatpush1.msra.mxu0 0.0
  %1451 = vmatprep.subr.mxu0 0.0
  %1452 = vmatpush1.msra.mxu0 0.0
  %1453 = vmatprep.subr.mxu0 0.0
  %1454 = vmatpush1.msra.mxu0 0.0
  %1455 = vmatprep.subr.mxu0 0.0
  %1456 = vmatpush1.msra.mxu0 0.0
  %1457 = vmatprep.subr.mxu0 0.0
  %1458 = vmatpush1.msra.mxu0 0.0
  %1459 = vmatprep.subr.mxu0 0.0
  %1460 = vmatpush1.msra.mxu0 0.0
  %1461 = vmatprep.subr.mxu0 0.0
  %1462 = vmatpush1.msra.mxu0 0.0
  %1463 = vmatprep.subr.mxu0 0.0
  %1464 = vmatpush1.msra.mxu0 0.0
  %1465 = vmatprep.subr.mxu0 0.0
  %1466 = vmatpush1.msra.mxu0 0.0
  %1467 = vmatprep.subr.mxu0 0.0
  %1468 = vmatpush1.msra.mxu0 0.0
  %1469 = vmatprep.subr.mxu0 0.0
  %1470 = vmatpush1.msra.mxu0 0.0
  %1471 = vmatprep.subr.mxu0 0.0
  %1472 = vmatpush1.msra.mxu0 0.0
  %1473 = vmatprep.subr.mxu0 0.0
  %1474 = vmatpush1.msra.mxu0 0.0
  %1475 = vmatprep.subr.mxu0 0.0
  %1476 = vmatpush1.msra.mxu0 0.0
  %1477 = vmatprep.mubr.f32.mxu0 0.0
  %v1478 = vand.u32 %v850, 4294901760
  %v1479 = vsub.f32 %v850, %v1478
  %v1480 = vand.u32 %v1479, 4294901760
  %v1481 = vsub.f32 %v1479, %v1480
  %v1482 = vand.u32 %v1481, 4294901760
  %1483 = vmatmul.mubr.f32.gmra.mrb[0].mxu0 %v1482
  %v1484 = vpop.f32.mrb[0].mxu0
  %v1485 = vadd.f32 %v846, %v1484
  %v1486 = vpop.f32.mrb[0].mxu0
  %v1487 = vadd.f32 %v846, %v1486
  %1488 = vdwg.mxu0
  %v1489 = vand.u32 %v818, 4294901760
  %v1490 = vsub.f32 %v818, %v1489
  %v1491 = vand.u32 %v1490, 4294901760
  %v1492 = vsub.f32 %v1490, %v1491
  %v1493 = vand.u32 %v1492, 4294901760
  %1494 = vmatprep.subr.mxu0 %v1493
  %v1495 = vand.u32 %v817, 4294901760
  %v1496 = vsub.f32 %v817, %v1495
  %v1497 = vand.u32 %v1496, 4294901760
  %v1498 = vsub.f32 %v1496, %v1497
  %v1499 = vand.u32 %v1498, 4294901760
  %1500 = vmatpush1.msra.mxu0 %v1499
  %v1501 = vand.u32 %v832, 4294901760
  %v1502 = vsub.f32 %v832, %v1501
  %v1503 = vand.u32 %v1502, 4294901760
  %v1504 = vsub.f32 %v1502, %v1503
  %v1505 = vand.u32 %v1504, 4294901760
  %1506 = vmatprep.subr.mxu0 %v1505
  %v1507 = vand.u32 %v831, 4294901760
  %v1508 = vsub.f32 %v831, %v1507
  %v1509 = vand.u32 %v1508, 4294901760
  %v1510 = vsub.f32 %v1508, %v1509
  %v1511 = vand.u32 %v1510, 4294901760
  %1512 = vmatpush1.msra.mxu0 %v1511
  %v1513 = vand.u32 %v842, 4294901760
  %v1514 = vsub.f32 %v842, %v1513
  %v1515 = vand.u32 %v1514, 4294901760
  %v1516 = vsub.f32 %v1514, %v1515
  %v1517 = vand.u32 %v1516, 4294901760
  %1518 = vmatprep.subr.mxu0 %v1517
  %v1519 = vand.u32 %v841, 4294901760
  %v1520 = vsub.f32 %v841, %v1519
  %v1521 = vand.u32 %v1520, 4294901760
  %v1522 = vsub.f32 %v1520, %v1521
  %v1523 = vand.u32 %v1522, 4294901760
  %1524 = vmatpush1.msra.mxu0 %v1523
  %v1525 = vand.u32 %v860, 4294901760
  %v1526 = vsub.f32 %v860, %v1525
  %v1527 = vand.u32 %v1526, 4294901760
  %v1528 = vsub.f32 %v1526, %v1527
  %v1529 = vand.u32 %v1528, 4294901760
  %1530 = vmatprep.subr.mxu0 %v1529
  %v1531 = vand.u32 %v857, 4294901760
  %v1532 = vsub.f32 %v857, %v1531
  %v1533 = vand.u32 %v1532, 4294901760
  %v1534 = vsub.f32 %v1532, %v1533
  %v1535 = vand.u32 %v1534, 4294901760
  %1536 = vmatpush1.msra.mxu0 %v1535
  %1537 = vmatprep.subr.mxu0 0.0
  %1538 = vmatpush1.msra.mxu0 0.0
  %1539 = vmatprep.subr.mxu0 0.0
  %1540 = vmatpush1.msra.mxu0 0.0
  %1541 = vmatprep.subr.mxu0 0.0
  %1542 = vmatpush1.msra.mxu0 0.0
  %1543 = vmatprep.subr.mxu0 0.0
  %1544 = vmatpush1.msra.mxu0 0.0
  %1545 = vmatprep.subr.mxu0 0.0
  %1546 = vmatpush1.msra.mxu0 0.0
  %1547 = vmatprep.subr.mxu0 0.0
  %1548 = vmatpush1.msra.mxu0 0.0
  %1549 = vmatprep.subr.mxu0 0.0
  %1550 = vmatpush1.msra.mxu0 0.0
  %1551 = vmatprep.subr.mxu0 0.0
  %1552 = vmatpush1.msra.mxu0 0.0
  %1553 = vmatprep.subr.mxu0 0.0
  %1554 = vmatpush1.msra.mxu0 0.0
  %1555 = vmatprep.subr.mxu0 0.0
  %1556 = vmatpush1.msra.mxu0 0.0
  %1557 = vmatprep.subr.mxu0 0.0
  %1558 = vmatpush1.msra.mxu0 0.0
  %1559 = vmatprep.subr.mxu0 0.0
  %1560 = vmatpush1.msra.mxu0 0.0
  %1561 = vmatprep.subr.mxu0 0.0
  %1562 = vmatpush1.msra.mxu0 0.0
  %1563 = vmatprep.subr.mxu0 0.0
  %1564 = vmatpush1.msra.mxu0 0.0
  %1565 = vmatprep.subr.mxu0 0.0
  %1566 = vmatpush1.msra.mxu0 0.0
  %1567 = vmatprep.subr.mxu0 0.0
  %1568 = vmatpush1.msra.mxu0 0.0
  %1569 = vmatprep.subr.mxu0 0.0
  %1570 = vmatpush1.msra.mxu0 0.0
  %1571 = vmatprep.subr.mxu0 0.0
  %1572 = vmatpush1.msra.mxu0 0.0
  %1573 = vmatprep.subr.mxu0 0.0
  %1574 = vmatpush1.msra.mxu0 0.0
  %1575 = vmatprep.subr.mxu0 0.0
  %1576 = vmatpush1.msra.mxu0 0.0
  %1577 = vmatprep.subr.mxu0 0.0
  %1578 = vmatpush1.msra.mxu0 0.0
  %1579 = vmatprep.subr.mxu0 0.0
  %1580 = vmatpush1.msra.mxu0 0.0
  %1581 = vmatprep.subr.mxu0 0.0
  %1582 = vmatpush1.msra.mxu0 0.0
  %1583 = vmatprep.subr.mxu0 0.0
  %1584 = vmatpush1.msra.mxu0 0.0
  %1585 = vmatprep.subr.mxu0 0.0
  %1586 = vmatpush1.msra.mxu0 0.0
  %1587 = vmatprep.subr.mxu0 0.0
  %1588 = vmatpush1.msra.mxu0 0.0
  %1589 = vmatprep.subr.mxu0 0.0
  %1590 = vmatpush1.msra.mxu0 0.0
  %1591 = vmatprep.subr.mxu0 0.0
  %1592 = vmatpush1.msra.mxu0 0.0
  %1593 = vmatprep.mubr.f32.mxu0 0.0
  %v1594 = vand.u32 %v850, 4294901760
  %1595 = vmatmul.mubr.f32.gmra.mrb[0].mxu0 %v1594
  %v1596 = vpop.f32.mrb[0].mxu0
  %v1597 = vadd.f32 %v1485, %v1596
  %v1598 = vpop.f32.mrb[0].mxu0
  %v1599 = vadd.f32 %v1487, %v1598
  %1600 = vdwg.mxu0
  %v1601 = vand.u32 %v818, 4294901760
  %v1602 = vsub.f32 %v818, %v1601
  %1603 = vmatprep.subr.mxu0 %v1602
  %v1604 = vand.u32 %v817, 4294901760
  %v1605 = vsub.f32 %v817, %v1604
  %1606 = vmatpush1.msra.mxu0 %v1605
  %v1607 = vand.u32 %v832, 4294901760
  %v1608 = vsub.f32 %v832, %v1607
  %1609 = vmatprep.subr.mxu0 %v1608
  %v1610 = vand.u32 %v831, 4294901760
  %v1611 = vsub.f32 %v831, %v1610
  %1612 = vmatpush1.msra.mxu0 %v1611
  %v1613 = vand.u32 %v842, 4294901760
  %v1614 = vsub.f32 %v842, %v1613
  %1615 = vmatprep.subr.mxu0 %v1614
  %v1616 = vand.u32 %v841, 4294901760
  %v1617 = vsub.f32 %v841, %v1616
  %1618 = vmatpush1.msra.mxu0 %v1617
  %v1619 = vand.u32 %v860, 4294901760
  %v1620 = vsub.f32 %v860, %v1619
  %1621 = vmatprep.subr.mxu0 %v1620
  %v1622 = vand.u32 %v857, 4294901760
  %v1623 = vsub.f32 %v857, %v1622
  %1624 = vmatpush1.msra.mxu0 %v1623
  %1625 = vmatprep.subr.mxu0 0.0
  %1626 = vmatpush1.msra.mxu0 0.0
  %1627 = vmatprep.subr.mxu0 0.0
  %1628 = vmatpush1.msra.mxu0 0.0
  %1629 = vmatprep.subr.mxu0 0.0
  %1630 = vmatpush1.msra.mxu0 0.0
  %1631 = vmatprep.subr.mxu0 0.0
  %1632 = vmatpush1.msra.mxu0 0.0
  %1633 = vmatprep.subr.mxu0 0.0
  %1634 = vmatpush1.msra.mxu0 0.0
  %1635 = vmatprep.subr.mxu0 0.0
  %1636 = vmatpush1.msra.mxu0 0.0
  %1637 = vmatprep.subr.mxu0 0.0
  %1638 = vmatpush1.msra.mxu0 0.0
  %1639 = vmatprep.subr.mxu0 0.0
  %1640 = vmatpush1.msra.mxu0 0.0
  %1641 = vmatprep.subr.mxu0 0.0
  %1642 = vmatpush1.msra.mxu0 0.0
  %1643 = vmatprep.subr.mxu0 0.0
  %1644 = vmatpush1.msra.mxu0 0.0
  %1645 = vmatprep.subr.mxu0 0.0
  %1646 = vmatpush1.msra.mxu0 0.0
  %1647 = vmatprep.subr.mxu0 0.0
  %1648 = vmatpush1.msra.mxu0 0.0
  %1649 = vmatprep.subr.mxu0 0.0
  %1650 = vmatpush1.msra.mxu0 0.0
  %1651 = vmatprep.subr.mxu0 0.0
  %1652 = vmatpush1.msra.mxu0 0.0
  %1653 = vmatprep.subr.mxu0 0.0
  %1654 = vmatpush1.msra.mxu0 0.0
  %1655 = vmatprep.subr.mxu0 0.0
  %1656 = vmatpush1.msra.mxu0 0.0
  %1657 = vmatprep.subr.mxu0 0.0
  %1658 = vmatpush1.msra.mxu0 0.0
  %1659 = vmatprep.subr.mxu0 0.0
  %1660 = vmatpush1.msra.mxu0 0.0
  %1661 = vmatprep.subr.mxu0 0.0
  %1662 = vmatpush1.msra.mxu0 0.0
  %1663 = vmatprep.subr.mxu0 0.0
  %1664 = vmatpush1.msra.mxu0 0.0
  %1665 = vmatprep.subr.mxu0 0.0
  %1666 = vmatpush1.msra.mxu0 0.0
  %1667 = vmatprep.subr.mxu0 0.0
  %1668 = vmatpush1.msra.mxu0 0.0
  %1669 = vmatprep.subr.mxu0 0.0
  %1670 = vmatpush1.msra.mxu0 0.0
  %1671 = vmatprep.subr.mxu0 0.0
  %1672 = vmatpush1.msra.mxu0 0.0
  %1673 = vmatprep.subr.mxu0 0.0
  %1674 = vmatpush1.msra.mxu0 0.0
  %1675 = vmatprep.subr.mxu0 0.0
  %1676 = vmatpush1.msra.mxu0 0.0
  %1677 = vmatprep.subr.mxu0 0.0
  %1678 = vmatpush1.msra.mxu0 0.0
  %1679 = vmatprep.subr.mxu0 0.0
  %1680 = vmatpush1.msra.mxu0 0.0
  %1681 = vmatprep.mubr.f32.mxu0 0.0
  %v1682 = vand.u32 %v850, 4294901760
  %v1683 = vsub.f32 %v850, %v1682
  %1684 = vmatmul.mubr.f32.gmra.mrb[0].mxu0 %v1683
  %v1685 = vpop.f32.mrb[0].mxu0
  %v1686 = vadd.f32 %v1597, %v1685
  %v1687 = vpop.f32.mrb[0].mxu0
  %v1688 = vadd.f32 %v1599, %v1687
  %1689 = vdwg.mxu0
  %v1690 = vand.u32 %v818, 4294901760
  %1691 = vmatprep.subr.mxu0 %v1690
  %v1692 = vand.u32 %v817, 4294901760
  %1693 = vmatpush1.msra.mxu0 %v1692
  %v1694 = vand.u32 %v832, 4294901760
  %1695 = vmatprep.subr.mxu0 %v1694
  %v1696 = vand.u32 %v831, 4294901760
  %1697 = vmatpush1.msra.mxu0 %v1696
  %v1698 = vand.u32 %v842, 4294901760
  %1699 = vmatprep.subr.mxu0 %v1698
  %v1700 = vand.u32 %v841, 4294901760
  %1701 = vmatpush1.msra.mxu0 %v1700
  %v1702 = vand.u32 %v860, 4294901760
  %1703 = vmatprep.subr.mxu0 %v1702
  %v1704 = vand.u32 %v857, 4294901760
  %1705 = vmatpush1.msra.mxu0 %v1704
  %1706 = vmatprep.subr.mxu0 0.0
  %1707 = vmatpush1.msra.mxu0 0.0
  %1708 = vmatprep.subr.mxu0 0.0
  %1709 = vmatpush1.msra.mxu0 0.0
  %1710 = vmatprep.subr.mxu0 0.0
  %1711 = vmatpush1.msra.mxu0 0.0
  %1712 = vmatprep.subr.mxu0 0.0
  %1713 = vmatpush1.msra.mxu0 0.0
  %1714 = vmatprep.subr.mxu0 0.0
  %1715 = vmatpush1.msra.mxu0 0.0
  %1716 = vmatprep.subr.mxu0 0.0
  %1717 = vmatpush1.msra.mxu0 0.0
  %1718 = vmatprep.subr.mxu0 0.0
  %1719 = vmatpush1.msra.mxu0 0.0
  %1720 = vmatprep.subr.mxu0 0.0
  %1721 = vmatpush1.msra.mxu0 0.0
  %1722 = vmatprep.subr.mxu0 0.0
  %1723 = vmatpush1.msra.mxu0 0.0
  %1724 = vmatprep.subr.mxu0 0.0
  %1725 = vmatpush1.msra.mxu0 0.0
  %1726 = vmatprep.subr.mxu0 0.0
  %1727 = vmatpush1.msra.mxu0 0.0
  %1728 = vmatprep.subr.mxu0 0.0
  %1729 = vmatpush1.msra.mxu0 0.0
  %1730 = vmatprep.subr.mxu0 0.0
  %1731 = vmatpush1.msra.mxu0 0.0
  %1732 = vmatprep.subr.mxu0 0.0
  %1733 = vmatpush1.msra.mxu0 0.0
  %1734 = vmatprep.subr.mxu0 0.0
  %1735 = vmatpush1.msra.mxu0 0.0
  %1736 = vmatprep.subr.mxu0 0.0
  %1737 = vmatpush1.msra.mxu0 0.0
  %1738 = vmatprep.subr.mxu0 0.0
  %1739 = vmatpush1.msra.mxu0 0.0
  %1740 = vmatprep.subr.mxu0 0.0
  %1741 = vmatpush1.msra.mxu0 0.0
  %1742 = vmatprep.subr.mxu0 0.0
  %1743 = vmatpush1.msra.mxu0 0.0
  %1744 = vmatprep.subr.mxu0 0.0
  %1745 = vmatpush1.msra.mxu0 0.0
  %1746 = vmatprep.subr.mxu0 0.0
  %1747 = vmatpush1.msra.mxu0 0.0
  %1748 = vmatprep.subr.mxu0 0.0
  %1749 = vmatpush1.msra.mxu0 0.0
  %1750 = vmatprep.subr.mxu0 0.0
  %1751 = vmatpush1.msra.mxu0 0.0
  %1752 = vmatprep.subr.mxu0 0.0
  %1753 = vmatpush1.msra.mxu0 0.0
  %1754 = vmatprep.subr.mxu0 0.0
  %1755 = vmatpush1.msra.mxu0 0.0
  %1756 = vmatprep.subr.mxu0 0.0
  %1757 = vmatpush1.msra.mxu0 0.0
  %1758 = vmatprep.subr.mxu0 0.0
  %1759 = vmatpush1.msra.mxu0 0.0
  %1760 = vmatprep.subr.mxu0 0.0
  %1761 = vmatpush1.msra.mxu0 0.0
  %1762 = vmatprep.mubr.f32.mxu0 0.0
  %v1763 = vand.u32 %v850, 4294901760
  %v1764 = vsub.f32 %v850, %v1763
  %v1765 = vand.u32 %v1764, 4294901760
  %1766 = vmatmul.mubr.f32.gmra.mrb[0].mxu0 %v1765
  %v1767 = vpop.f32.mrb[0].mxu0
  %v1768 = vadd.f32 %v1686, %v1767
  %v1769 = vpop.f32.mrb[0].mxu0
  %v1770 = vadd.f32 %v1688, %v1769
  %1771 = vdwg.mxu0
  %v1772 = vand.u32 %v818, 4294901760
  %v1773 = vsub.f32 %v818, %v1772
  %v1774 = vand.u32 %v1773, 4294901760
  %1775 = vmatprep.subr.mxu0 %v1774
  %v1776 = vand.u32 %v817, 4294901760
  %v1777 = vsub.f32 %v817, %v1776
  %v1778 = vand.u32 %v1777, 4294901760
  %1779 = vmatpush1.msra.mxu0 %v1778
  %v1780 = vand.u32 %v832, 4294901760
  %v1781 = vsub.f32 %v832, %v1780
  %v1782 = vand.u32 %v1781, 4294901760
  %1783 = vmatprep.subr.mxu0 %v1782
  %v1784 = vand.u32 %v831, 4294901760
  %v1785 = vsub.f32 %v831, %v1784
  %v1786 = vand.u32 %v1785, 4294901760
  %1787 = vmatpush1.msra.mxu0 %v1786
  %v1788 = vand.u32 %v842, 4294901760
  %v1789 = vsub.f32 %v842, %v1788
  %v1790 = vand.u32 %v1789, 4294901760
  %1791 = vmatprep.subr.mxu0 %v1790
  %v1792 = vand.u32 %v841, 4294901760
  %v1793 = vsub.f32 %v841, %v1792
  %v1794 = vand.u32 %v1793, 4294901760
  %1795 = vmatpush1.msra.mxu0 %v1794
  %v1796 = vand.u32 %v860, 4294901760
  %v1797 = vsub.f32 %v860, %v1796
  %v1798 = vand.u32 %v1797, 4294901760
  %1799 = vmatprep.subr.mxu0 %v1798
  %v1800 = vand.u32 %v857, 4294901760
  %v1801 = vsub.f32 %v857, %v1800
  %v1802 = vand.u32 %v1801, 4294901760
  %1803 = vmatpush1.msra.mxu0 %v1802
  %1804 = vmatprep.subr.mxu0 0.0
  %1805 = vmatpush1.msra.mxu0 0.0
  %1806 = vmatprep.subr.mxu0 0.0
  %1807 = vmatpush1.msra.mxu0 0.0
  %1808 = vmatprep.subr.mxu0 0.0
  %1809 = vmatpush1.msra.mxu0 0.0
  %1810 = vmatprep.subr.mxu0 0.0
  %1811 = vmatpush1.msra.mxu0 0.0
  %1812 = vmatprep.subr.mxu0 0.0
  %1813 = vmatpush1.msra.mxu0 0.0
  %1814 = vmatprep.subr.mxu0 0.0
  %1815 = vmatpush1.msra.mxu0 0.0
  %1816 = vmatprep.subr.mxu0 0.0
  %1817 = vmatpush1.msra.mxu0 0.0
  %1818 = vmatprep.subr.mxu0 0.0
  %1819 = vmatpush1.msra.mxu0 0.0
  %1820 = vmatprep.subr.mxu0 0.0
  %1821 = vmatpush1.msra.mxu0 0.0
  %1822 = vmatprep.subr.mxu0 0.0
  %1823 = vmatpush1.msra.mxu0 0.0
  %1824 = vmatprep.subr.mxu0 0.0
  %1825 = vmatpush1.msra.mxu0 0.0
  %1826 = vmatprep.subr.mxu0 0.0
  %1827 = vmatpush1.msra.mxu0 0.0
  %1828 = vmatprep.subr.mxu0 0.0
  %1829 = vmatpush1.msra.mxu0 0.0
  %1830 = vmatprep.subr.mxu0 0.0
  %1831 = vmatpush1.msra.mxu0 0.0
  %1832 = vmatprep.subr.mxu0 0.0
  %1833 = vmatpush1.msra.mxu0 0.0
  %1834 = vmatprep.subr.mxu0 0.0
  %1835 = vmatpush1.msra.mxu0 0.0
  %1836 = vmatprep.subr.mxu0 0.0
  %1837 = vmatpush1.msra.mxu0 0.0
  %1838 = vmatprep.subr.mxu0 0.0
  %1839 = vmatpush1.msra.mxu0 0.0
  %1840 = vmatprep.subr.mxu0 0.0
  %1841 = vmatpush1.msra.mxu0 0.0
  %1842 = vmatprep.subr.mxu0 0.0
  %1843 = vmatpush1.msra.mxu0 0.0
  %1844 = vmatprep.subr.mxu0 0.0
  %1845 = vmatpush1.msra.mxu0 0.0
  %1846 = vmatprep.subr.mxu0 0.0
  %1847 = vmatpush1.msra.mxu0 0.0
  %1848 = vmatprep.subr.mxu0 0.0
  %1849 = vmatpush1.msra.mxu0 0.0
  %1850 = vmatprep.subr.mxu0 0.0
  %1851 = vmatpush1.msra.mxu0 0.0
  %1852 = vmatprep.subr.mxu0 0.0
  %1853 = vmatpush1.msra.mxu0 0.0
  %1854 = vmatprep.subr.mxu0 0.0
  %1855 = vmatpush1.msra.mxu0 0.0
  %1856 = vmatprep.subr.mxu0 0.0
  %1857 = vmatpush1.msra.mxu0 0.0
  %1858 = vmatprep.subr.mxu0 0.0
  %1859 = vmatpush1.msra.mxu0 0.0
  %1860 = vmatprep.mubr.f32.mxu0 0.0
  %v1861 = vand.u32 %v850, 4294901760
  %1862 = vmatmul.mubr.f32.gmra.mrb[0].mxu0 %v1861
  %v1863 = vpop.f32.mrb[0].mxu0
  %v1864 = vadd.f32 %v1768, %v1863
  %v1865 = vpop.f32.mrb[0].mxu0
  %v1866 = vadd.f32 %v1770, %v1865
  %1867 = vdwg.mxu0
  %v1868 = vand.u32 %v818, 4294901760
  %1869 = vmatprep.subr.mxu0 %v1868
  %v1870 = vand.u32 %v817, 4294901760
  %1871 = vmatpush1.msra.mxu0 %v1870
  %v1872 = vand.u32 %v832, 4294901760
  %1873 = vmatprep.subr.mxu0 %v1872
  %v1874 = vand.u32 %v831, 4294901760
  %1875 = vmatpush1.msra.mxu0 %v1874
  %v1876 = vand.u32 %v842, 4294901760
  %1877 = vmatprep.subr.mxu0 %v1876
  %v1878 = vand.u32 %v841, 4294901760
  %1879 = vmatpush1.msra.mxu0 %v1878
  %v1880 = vand.u32 %v860, 4294901760
  %1881 = vmatprep.subr.mxu0 %v1880
  %v1882 = vand.u32 %v857, 4294901760
  %1883 = vmatpush1.msra.mxu0 %v1882
  %1884 = vmatprep.subr.mxu0 0.0
  %1885 = vmatpush1.msra.mxu0 0.0
  %1886 = vmatprep.subr.mxu0 0.0
  %1887 = vmatpush1.msra.mxu0 0.0
  %1888 = vmatprep.subr.mxu0 0.0
  %1889 = vmatpush1.msra.mxu0 0.0
  %1890 = vmatprep.subr.mxu0 0.0
  %1891 = vmatpush1.msra.mxu0 0.0
  %1892 = vmatprep.subr.mxu0 0.0
  %1893 = vmatpush1.msra.mxu0 0.0
  %1894 = vmatprep.subr.mxu0 0.0
  %1895 = vmatpush1.msra.mxu0 0.0
  %1896 = vmatprep.subr.mxu0 0.0
  %1897 = vmatpush1.msra.mxu0 0.0
  %1898 = vmatprep.subr.mxu0 0.0
  %1899 = vmatpush1.msra.mxu0 0.0
  %1900 = vmatprep.subr.mxu0 0.0
  %1901 = vmatpush1.msra.mxu0 0.0
  %1902 = vmatprep.subr.mxu0 0.0
  %1903 = vmatpush1.msra.mxu0 0.0
  %1904 = vmatprep.subr.mxu0 0.0
  %1905 = vmatpush1.msra.mxu0 0.0
  %1906 = vmatprep.subr.mxu0 0.0
  %1907 = vmatpush1.msra.mxu0 0.0
  %1908 = vmatprep.subr.mxu0 0.0
  %1909 = vmatpush1.msra.mxu0 0.0
  %1910 = vmatprep.subr.mxu0 0.0
  %1911 = vmatpush1.msra.mxu0 0.0
  %1912 = vmatprep.subr.mxu0 0.0
  %1913 = vmatpush1.msra.mxu0 0.0
  %1914 = vmatprep.subr.mxu0 0.0
  %1915 = vmatpush1.msra.mxu0 0.0
  %1916 = vmatprep.subr.mxu0 0.0
  %1917 = vmatpush1.msra.mxu0 0.0
  %1918 = vmatprep.subr.mxu0 0.0
  %1919 = vmatpush1.msra.mxu0 0.0
  %1920 = vmatprep.subr.mxu0 0.0
  %1921 = vmatpush1.msra.mxu0 0.0
  %1922 = vmatprep.subr.mxu0 0.0
  %1923 = vmatpush1.msra.mxu0 0.0
  %1924 = vmatprep.subr.mxu0 0.0
  %1925 = vmatpush1.msra.mxu0 0.0
  %1926 = vmatprep.subr.mxu0 0.0
  %1927 = vmatpush1.msra.mxu0 0.0
  %1928 = vmatprep.subr.mxu0 0.0
  %1929 = vmatpush1.msra.mxu0 0.0
  %1930 = vmatprep.subr.mxu0 0.0
  %1931 = vmatpush1.msra.mxu0 0.0
  %1932 = vmatprep.subr.mxu0 0.0
  %1933 = vmatpush1.msra.mxu0 0.0
  %1934 = vmatprep.subr.mxu0 0.0
  %1935 = vmatpush1.msra.mxu0 0.0
  %1936 = vmatprep.subr.mxu0 0.0
  %1937 = vmatpush1.msra.mxu0 0.0
  %1938 = vmatprep.subr.mxu0 0.0
  %1939 = vmatpush1.msra.mxu0 0.0
  %1940 = vmatprep.mubr.f32.mxu0 0.0
  %v1941 = vand.u32 %v850, 4294901760
  %1942 = vmatmul.mubr.f32.gmra.mrb[0].mxu0 %v1941
  %v1943 = vpop.f32.mrb[0].mxu0
  %v1944 = vadd.f32 %v1864, %v1943
  %v1945 = vpop.f32.mrb[0].mxu0
  %v1946 = vadd.f32 %v1866, %v1945
  %1947 = vdwg.mxu0
  %v1948 = vmax.f32 %v1401, 0.0
  %v1949 = vmax.f32 %v1403, 0.0
  %v1950 = vmax.f32 %v1944, 0.0
  %v1951 = vmax.f32 %v1946, 0.0
  %v1954 = vrot.slane %v1950, 4
  %v1955 = vrot.slane %v1951, 4
  %v1958 = vsel %vm34, %v1948, %v1954
  %v1959 = vsel %vm34, %v1949, %v1955
  %1960 = vst [vmem:[%s4] sm:$0xff] %v1958
  %1961 = vst [vmem:[%s4 + $0x8] sm:$0xff] %v1959
  // Predicated region
  $region18: #{conv_transpose2d_relu.1} parent=0 // pred_check
    _
  $region19: #{conv_transpose2d_relu.1} parent=0 // pred_check_branch
    %1963 = sbr.rel (0) target = $region21
  $region20: #{conv_transpose2d_relu.1} parent=0 // pred_region
    _
  $region21: #{conv_transpose2d_relu.1} parent=0 // pred_fallthru
    _
  // Predicated region
  $region22: #{conv_transpose2d_relu.1} parent=0 // pred_check
    _
  $region23: #{conv_transpose2d_relu.1} parent=0 // pred_check_branch
    %1965 = sbr.rel (0) target = $region25
  $region24: #{conv_transpose2d_relu.1} parent=0 // pred_region
    _
  $region25: #{conv_transpose2d_relu.1} parent=0 // pred_fallthru
    _

</llo_original>
